<compile_context>
chip_gen: v6e
topology: v6e:2x2x1
jax: 0.10.0
libtpu: 0.0.40
codegen_flags: <defaults>
</compile_context>

<pallas_src>
import jax
import jax.numpy as jnp
from jax.experimental import pallas as pl
from jax.experimental.pallas import tpu as pltpu


def _tree_max(chunks):
    """Pairwise (tree) max over a list of equally shaped arrays."""
    while len(chunks) > 1:
        nxt = [jnp.maximum(chunks[i], chunks[i + 1])
               for i in range(0, len(chunks) - 1, 2)]
        if len(chunks) % 2:
            nxt.append(chunks[-1])
        chunks = nxt
    return chunks[0]


def _pointnet_kernel(x_ref, m_ref, wpreT_ref, w1aT_ref, w1bT_ref, w2T_ref,
                     wo1T_ref, bo1_ref, wo2T_ref, bo2_ref, out_ref):
    """One tile of `tile_r` polylines; the row axis is the lane axis.

    x_ref  : (N, C_pad, tile_r) bf16   point inputs (row axis last)
    m_ref  : (N, tile_r)        bf16   point validity (exactly 0/1)
    w*T_ref: transposed Linear weights, bf16
    b*_ref : biases as (H, 1) f32 columns
    out_ref: (H, tile_r)        f32    encoded polylines (row axis last)
    """
    f32 = jnp.float32
    bf16 = jnp.bfloat16
    N = x_ref.shape[0]
    TR = out_ref.shape[1]

    wpre = wpreT_ref[...]            # (H, C_pad) bf16
    w1a = w1aT_ref[...]              # (H, H) bf16  (point-feature half of W1)
    w1b = w1bT_ref[...]              # (H, H) bf16  (pooled half of W1)
    w2 = w2T_ref[...]
    wo1 = wo1T_ref[...]
    wo2 = wo2T_ref[...]

    m = m_ref[...].astype(f32)                                          # (N, TR)

    # Fold the point axis into lanes: ONE dot per layer per tile.
    x_all = jnp.concatenate([x_ref[n] for n in range(N)], axis=-1)      # (C_pad, N*TR) bf16
    m_all = jnp.concatenate([m[n:n + 1, :] for n in range(N)], axis=-1)  # (1, N*TR)

    # ---- pre_mlps: Linear(no bias)+ReLU; zeroing invalid == masked scatter ----
    f_all = jnp.maximum(
        jnp.dot(wpre, x_all, preferred_element_type=f32), 0.0) * m_all  # (H, N*TR) f32

    # ---- max-pool over points (tree reduction over lane-aligned chunks) ----
    pooled = _tree_max([f_all[:, n * TR:(n + 1) * TR] for n in range(N)])  # (H, TR)

    # ---- mlps: cat(f, pooled) @ W1 == W1a^T f + W1b^T pooled ----
    gp = jnp.dot(w1b, pooled.astype(bf16), preferred_element_type=f32)     # (H, TR)
    g1 = jnp.dot(w1a, f_all.astype(bf16), preferred_element_type=f32)      # (H, N*TR)
    h1_bf = jnp.concatenate(
        [jnp.maximum(g1[:, n * TR:(n + 1) * TR] + gp, 0.0).astype(bf16)
         for n in range(N)], axis=-1)                                       # (H, N*TR) bf16

    h2 = jnp.maximum(
        jnp.dot(w2, h1_bf, preferred_element_type=f32), 0.0) * m_all        # (H, N*TR) f32
    pooled2 = _tree_max([h2[:, n * TR:(n + 1) * TR] for n in range(N)])     # (H, TR)

    # ---- polyline validity: any valid point ----
    valid = jnp.max(m, axis=0, keepdims=True) > 0.0                         # (1, TR)

    # ---- out_mlps: Linear+bias+ReLU, Linear+bias (ret_before_act=True) ----
    o1 = jnp.maximum(
        jnp.dot(wo1, pooled2.astype(bf16), preferred_element_type=f32) + bo1_ref[...],
        0.0)
    o2 = jnp.dot(wo2, o1.astype(bf16), preferred_element_type=f32) + bo2_ref[...]
    out_ref[...] = jnp.where(valid, o2, 0.0)                                # (H, TR)


def pointnet_polyline_encoder(polylines, polylines_mask, params, *, tile_r=512):
    """polylines: (B, P, N, C) float; polylines_mask: (B, P, N) bool -> (B, P, H) f32."""
    B, P, N, C = polylines.shape
    H = params["w_pre"].shape[1]
    assert H % 8 == 0, "hidden_dim must be a multiple of 8"
    R = B * P
    LANE = 128

    # --- row tiling: lane-dense rows; keep >= 2 grid steps when R allows it
    #     so the 'parallel' axis can shard across both v7x TensorCores. ---
    r_blocks = -(-R // LANE)
    tr_blocks = max(1, tile_r // LANE)
    if r_blocks >= 2:
        tr_blocks = min(tr_blocks, max(1, r_blocks // 2))
    else:
        tr_blocks = 1
    tile_r = tr_blocks * LANE
    grid_r = -(-r_blocks // tr_blocks)
    R_pad = grid_r * tile_r

    # --- pad channel dim to a packed-sublane multiple (9 -> 16), points to x8.
    #     Padded points carry mask==0, padded channels hit zero weight rows. ---
    C_pad = ((max(C, 1) + 15) // 16) * 16
    N_pad = ((N + 7) // 8) * 8

    x = jnp.pad(polylines.reshape(R, N, C).astype(jnp.bfloat16),
                ((0, R_pad - R), (0, N_pad - N), (0, C_pad - C)))
    m = jnp.pad(polylines_mask.reshape(R, N).astype(jnp.bfloat16),
                ((0, R_pad - R), (0, N_pad - N)))

    # Row axis -> lanes (wrapper-side layout plumbing done by XLA).
    x_t = jnp.transpose(x, (1, 2, 0))                      # (N_pad, C_pad, R_pad)
    m_t = jnp.transpose(m, (1, 0))                         # (N_pad, R_pad)

    bf16 = jnp.bfloat16
    wpreT = jnp.pad(params["w_pre"], ((0, C_pad - C), (0, 0))).T.astype(bf16)  # (H, C_pad)
    w1aT = params["w1a"].T.astype(bf16)
    w1bT = params["w1b"].T.astype(bf16)
    w2T = params["w2"].T.astype(bf16)
    wo1T = params["wo1"].T.astype(bf16)
    wo2T = params["wo2"].T.astype(bf16)
    bo1c = params["bo1"].T.astype(jnp.float32)             # (H, 1)
    bo2c = params["bo2"].T.astype(jnp.float32)

    full2d = lambda i: (0, 0)

    flops = 2 * R_pad * N_pad * (C_pad * H + 2 * H * H) + 2 * R_pad * (3 * H * H)
    bytes_accessed = (x_t.size * 2 + m_t.size * 2 + H * R_pad * 4
                      + 2 * (H * C_pad + 5 * H * H) + 4 * 2 * H)

    out_t = pl.pallas_call(
        _pointnet_kernel,
        out_shape=jax.ShapeDtypeStruct((H, R_pad), jnp.float32),
        grid=(grid_r,),
        in_specs=[
            pl.BlockSpec((N_pad, C_pad, tile_r), lambda i: (0, 0, i)),  # x
            pl.BlockSpec((N_pad, tile_r), lambda i: (0, i)),            # mask
            pl.BlockSpec((H, C_pad), full2d),                           # w_pre^T
            pl.BlockSpec((H, H), full2d),                               # w1a^T
            pl.BlockSpec((H, H), full2d),                               # w1b^T
            pl.BlockSpec((H, H), full2d),                               # w2^T
            pl.BlockSpec((H, H), full2d),                               # wo1^T
            pl.BlockSpec((H, 1), full2d),                               # bo1
            pl.BlockSpec((H, H), full2d),                               # wo2^T
            pl.BlockSpec((H, 1), full2d),                               # bo2
        ],
        out_specs=pl.BlockSpec((H, tile_r), lambda i: (0, i)),          # lane-dense out
        compiler_params=pltpu.CompilerParams(
            dimension_semantics=("parallel",),
            vmem_limit_bytes=32 * 1024 * 1024,
        ),
        cost_estimate=pl.CostEstimate(
            flops=int(flops), transcendentals=0, bytes_accessed=int(bytes_accessed)),
    )(x_t, m_t, wpreT, w1aT, w1bT, w2T, wo1T, bo1c, wo2T, bo2c)

    return out_t[:, :R].T.reshape(B, P, H)


def reference_forward(polylines, polylines_mask, params):
    """Pure-JAX reference mirroring the kernel's bf16 rounding points (f32 accumulation)."""
    f32, bf16 = jnp.float32, jnp.bfloat16

    def mm(a, b):
        return jnp.matmul(a.astype(bf16), b.astype(bf16), preferred_element_type=f32)

    m = polylines_mask.astype(f32)[..., None]                        # (B,P,N,1)
    f = jnp.maximum(mm(polylines, params["w_pre"]), 0.0) * m         # pre_mlps + scatter
    pooled = jnp.max(f, axis=2, keepdims=True)                       # (B,P,1,H)
    h1 = jnp.maximum(mm(f, params["w1a"]) + mm(pooled, params["w1b"]), 0.0)
    h2 = jnp.maximum(mm(h1, params["w2"]), 0.0) * m
    pooled2 = jnp.max(h2, axis=2)                                    # (B,P,H)
    valid = jnp.max(polylines_mask.astype(f32), axis=-1) > 0
    o1 = jnp.maximum(mm(pooled2, params["wo1"]) + params["bo1"], 0.0)
    o2 = mm(o1, params["wo2"]) + params["bo2"]
    return jnp.where(valid[..., None], o2, 0.0)


def init_params(key, in_dim, hidden_dim):
    ks = jax.random.split(key, 8)
    s = 0.1
    return {
        "w_pre": s * jax.random.normal(ks[0], (in_dim, hidden_dim), jnp.float32),
        "w1a":   s * jax.random.normal(ks[1], (hidden_dim, hidden_dim), jnp.float32),
        "w1b":   s * jax.random.normal(ks[2], (hidden_dim, hidden_dim), jnp.float32),
        "w2":    s * jax.random.normal(ks[3], (hidden_dim, hidden_dim), jnp.float32),
        "wo1":   s * jax.random.normal(ks[4], (hidden_dim, hidden_dim), jnp.float32),
        "bo1":   s * jax.random.normal(ks[5], (1, hidden_dim), jnp.float32),
        "wo2":   s * jax.random.normal(ks[6], (hidden_dim, hidden_dim), jnp.float32),
        "bo2":   s * jax.random.normal(ks[7], (1, hidden_dim), jnp.float32),
    }


if __name__ == "__main__":
    # small shapes: batch=2, num_polylines=8, num_points=16, in_dim=9, hidden=32
    # layer_cfg: NUM_MLP_LAYERS=3, NUM_PRE_LAYERS=1  -> pre: 1 layer, mlps: 2 layers
    B, P, N, C, H = 2, 8, 16, 9, 32
    key = jax.random.PRNGKey(0)
    k_x, k_m, k_p = jax.random.split(key, 3)

    polylines = jax.random.normal(k_x, (B, P, N, C), jnp.float32)
    polylines_mask = jax.random.bernoulli(k_m, 0.7, (B, P, N))
    # force a couple of fully-invalid polylines to exercise the valid_mask path
    polylines_mask = polylines_mask.at[0, 0].set(False).at[1, 3].set(False)

    params = init_params(k_p, C, H)

    out = pointnet_polyline_encoder(polylines, polylines_mask, params)
    out = jax.block_until_ready(out)

    ref = reference_forward(polylines, polylines_mask, params)

    assert out.shape == (B, P, H)
    max_err = float(jnp.max(jnp.abs(out - ref)))
    assert bool(jnp.allclose(out, ref, atol=1e-2, rtol=1e-2)), \
        f"mismatch vs JAX reference, max abs err {max_err}"

    print("KERNEL_OK")
</pallas_src>

<mosaic_0001>
module attributes {stable_mosaic.version = 11 : i64} {
  func.func @_pointnet_kernel(%arg0: i32, %arg1: memref<16x16x128xbf16, #tpu.memory_space<vmem>>, %arg2: memref<16x128xbf16, #tpu.memory_space<vmem>>, %arg3: memref<32x16xbf16, #tpu.memory_space<vmem>>, %arg4: memref<32x32xbf16, #tpu.memory_space<vmem>>, %arg5: memref<32x32xbf16, #tpu.memory_space<vmem>>, %arg6: memref<32x32xbf16, #tpu.memory_space<vmem>>, %arg7: memref<32x32xbf16, #tpu.memory_space<vmem>>, %arg8: memref<32x1xf32, #tpu.memory_space<vmem>>, %arg9: memref<32x32xbf16, #tpu.memory_space<vmem>>, %arg10: memref<32x1xf32, #tpu.memory_space<vmem>>, %arg11: memref<32x128xf32, #tpu.memory_space<vmem>>) attributes {dimension_semantics = [#tpu.dimension_semantics<parallel>], iteration_bounds = array<i64: 1>, scalar_prefetch = 0 : i64, scratch_operands = 0 : i64, tpu.core_type = #tpu.core_type<tc>, window_params = [{transform_indices = @transform_0, window_bounds = array<i64: 16, 16, 128>}, {transform_indices = @transform_1, window_bounds = array<i64: 16, 128>}, {pipeline_mode = #tpu.pipeline_mode<synchronous>, transform_indices = @transform_2, window_bounds = array<i64: 32, 16>}, {pipeline_mode = #tpu.pipeline_mode<synchronous>, transform_indices = @transform_3, window_bounds = array<i64: 32, 32>}, {pipeline_mode = #tpu.pipeline_mode<synchronous>, transform_indices = @transform_4, window_bounds = array<i64: 32, 32>}, {pipeline_mode = #tpu.pipeline_mode<synchronous>, transform_indices = @transform_5, window_bounds = array<i64: 32, 32>}, {pipeline_mode = #tpu.pipeline_mode<synchronous>, transform_indices = @transform_6, window_bounds = array<i64: 32, 32>}, {pipeline_mode = #tpu.pipeline_mode<synchronous>, transform_indices = @transform_7, window_bounds = array<i64: 32, 1>}, {pipeline_mode = #tpu.pipeline_mode<synchronous>, transform_indices = @transform_8, window_bounds = array<i64: 32, 32>}, {pipeline_mode = #tpu.pipeline_mode<synchronous>, transform_indices = @transform_9, window_bounds = array<i64: 32, 1>}, {transform_indices = @transform_10, window_bounds = array<i64: 32, 128>}]} {
    %c0 = arith.constant 0 : index
    %c0_0 = arith.constant 0 : index
    %0 = vector.load %arg3[%c0, %c0_0] : memref<32x16xbf16, #tpu.memory_space<vmem>>, vector<32x16xbf16>
    %c0_1 = arith.constant 0 : index
    %c0_2 = arith.constant 0 : index
    %1 = vector.load %arg4[%c0_1, %c0_2] : memref<32x32xbf16, #tpu.memory_space<vmem>>, vector<32x32xbf16>
    %c0_3 = arith.constant 0 : index
    %c0_4 = arith.constant 0 : index
    %2 = vector.load %arg5[%c0_3, %c0_4] : memref<32x32xbf16, #tpu.memory_space<vmem>>, vector<32x32xbf16>
    %c0_5 = arith.constant 0 : index
    %c0_6 = arith.constant 0 : index
    %3 = vector.load %arg6[%c0_5, %c0_6] : memref<32x32xbf16, #tpu.memory_space<vmem>>, vector<32x32xbf16>
    %c0_7 = arith.constant 0 : index
    %c0_8 = arith.constant 0 : index
    %4 = vector.load %arg7[%c0_7, %c0_8] : memref<32x32xbf16, #tpu.memory_space<vmem>>, vector<32x32xbf16>
    %c0_9 = arith.constant 0 : index
    %c0_10 = arith.constant 0 : index
    %5 = vector.load %arg9[%c0_9, %c0_10] : memref<32x32xbf16, #tpu.memory_space<vmem>>, vector<32x32xbf16>
    %c0_11 = arith.constant 0 : index
    %c0_12 = arith.constant 0 : index
    %6 = vector.load %arg2[%c0_11, %c0_12] : memref<16x128xbf16, #tpu.memory_space<vmem>>, vector<16x128xbf16>
    %7 = arith.extf %6 : vector<16x128xbf16> to vector<16x128xf32>
    %c0_13 = arith.constant 0 : index
    %c0_14 = arith.constant 0 : index
    %c0_15 = arith.constant 0 : index
    %8 = vector.load %arg1[%c0_13, %c0_14, %c0_15] : memref<16x16x128xbf16, #tpu.memory_space<vmem>>, vector<1x16x128xbf16>
    %9 = vector.shape_cast %8 : vector<1x16x128xbf16> to vector<16x128xbf16>
    %c1 = arith.constant 1 : index
    %c0_16 = arith.constant 0 : index
    %c0_17 = arith.constant 0 : index
    %10 = vector.load %arg1[%c1, %c0_16, %c0_17] : memref<16x16x128xbf16, #tpu.memory_space<vmem>>, vector<1x16x128xbf16>
    %11 = vector.shape_cast %10 : vector<1x16x128xbf16> to vector<16x128xbf16>
    %c2 = arith.constant 2 : index
    %c0_18 = arith.constant 0 : index
    %c0_19 = arith.constant 0 : index
    %12 = vector.load %arg1[%c2, %c0_18, %c0_19] : memref<16x16x128xbf16, #tpu.memory_space<vmem>>, vector<1x16x128xbf16>
    %13 = vector.shape_cast %12 : vector<1x16x128xbf16> to vector<16x128xbf16>
    %c3 = arith.constant 3 : index
    %c0_20 = arith.constant 0 : index
    %c0_21 = arith.constant 0 : index
    %14 = vector.load %arg1[%c3, %c0_20, %c0_21] : memref<16x16x128xbf16, #tpu.memory_space<vmem>>, vector<1x16x128xbf16>
    %15 = vector.shape_cast %14 : vector<1x16x128xbf16> to vector<16x128xbf16>
    %c4 = arith.constant 4 : index
    %c0_22 = arith.constant 0 : index
    %c0_23 = arith.constant 0 : index
    %16 = vector.load %arg1[%c4, %c0_22, %c0_23] : memref<16x16x128xbf16, #tpu.memory_space<vmem>>, vector<1x16x128xbf16>
    %17 = vector.shape_cast %16 : vector<1x16x128xbf16> to vector<16x128xbf16>
    %c5 = arith.constant 5 : index
    %c0_24 = arith.constant 0 : index
    %c0_25 = arith.constant 0 : index
    %18 = vector.load %arg1[%c5, %c0_24, %c0_25] : memref<16x16x128xbf16, #tpu.memory_space<vmem>>, vector<1x16x128xbf16>
    %19 = vector.shape_cast %18 : vector<1x16x128xbf16> to vector<16x128xbf16>
    %c6 = arith.constant 6 : index
    %c0_26 = arith.constant 0 : index
    %c0_27 = arith.constant 0 : index
    %20 = vector.load %arg1[%c6, %c0_26, %c0_27] : memref<16x16x128xbf16, #tpu.memory_space<vmem>>, vector<1x16x128xbf16>
    %21 = vector.shape_cast %20 : vector<1x16x128xbf16> to vector<16x128xbf16>
    %c7 = arith.constant 7 : index
    %c0_28 = arith.constant 0 : index
    %c0_29 = arith.constant 0 : index
    %22 = vector.load %arg1[%c7, %c0_28, %c0_29] : memref<16x16x128xbf16, #tpu.memory_space<vmem>>, vector<1x16x128xbf16>
    %23 = vector.shape_cast %22 : vector<1x16x128xbf16> to vector<16x128xbf16>
    %c8 = arith.constant 8 : index
    %c0_30 = arith.constant 0 : index
    %c0_31 = arith.constant 0 : index
    %24 = vector.load %arg1[%c8, %c0_30, %c0_31] : memref<16x16x128xbf16, #tpu.memory_space<vmem>>, vector<1x16x128xbf16>
    %25 = vector.shape_cast %24 : vector<1x16x128xbf16> to vector<16x128xbf16>
    %c9 = arith.constant 9 : index
    %c0_32 = arith.constant 0 : index
    %c0_33 = arith.constant 0 : index
    %26 = vector.load %arg1[%c9, %c0_32, %c0_33] : memref<16x16x128xbf16, #tpu.memory_space<vmem>>, vector<1x16x128xbf16>
    %27 = vector.shape_cast %26 : vector<1x16x128xbf16> to vector<16x128xbf16>
    %c10 = arith.constant 10 : index
    %c0_34 = arith.constant 0 : index
    %c0_35 = arith.constant 0 : index
    %28 = vector.load %arg1[%c10, %c0_34, %c0_35] : memref<16x16x128xbf16, #tpu.memory_space<vmem>>, vector<1x16x128xbf16>
    %29 = vector.shape_cast %28 : vector<1x16x128xbf16> to vector<16x128xbf16>
    %c11 = arith.constant 11 : index
    %c0_36 = arith.constant 0 : index
    %c0_37 = arith.constant 0 : index
    %30 = vector.load %arg1[%c11, %c0_36, %c0_37] : memref<16x16x128xbf16, #tpu.memory_space<vmem>>, vector<1x16x128xbf16>
    %31 = vector.shape_cast %30 : vector<1x16x128xbf16> to vector<16x128xbf16>
    %c12 = arith.constant 12 : index
    %c0_38 = arith.constant 0 : index
    %c0_39 = arith.constant 0 : index
    %32 = vector.load %arg1[%c12, %c0_38, %c0_39] : memref<16x16x128xbf16, #tpu.memory_space<vmem>>, vector<1x16x128xbf16>
    %33 = vector.shape_cast %32 : vector<1x16x128xbf16> to vector<16x128xbf16>
    %c13 = arith.constant 13 : index
    %c0_40 = arith.constant 0 : index
    %c0_41 = arith.constant 0 : index
    %34 = vector.load %arg1[%c13, %c0_40, %c0_41] : memref<16x16x128xbf16, #tpu.memory_space<vmem>>, vector<1x16x128xbf16>
    %35 = vector.shape_cast %34 : vector<1x16x128xbf16> to vector<16x128xbf16>
    %c14 = arith.constant 14 : index
    %c0_42 = arith.constant 0 : index
    %c0_43 = arith.constant 0 : index
    %36 = vector.load %arg1[%c14, %c0_42, %c0_43] : memref<16x16x128xbf16, #tpu.memory_space<vmem>>, vector<1x16x128xbf16>
    %37 = vector.shape_cast %36 : vector<1x16x128xbf16> to vector<16x128xbf16>
    %c15 = arith.constant 15 : index
    %c0_44 = arith.constant 0 : index
    %c0_45 = arith.constant 0 : index
    %38 = vector.load %arg1[%c15, %c0_44, %c0_45] : memref<16x16x128xbf16, #tpu.memory_space<vmem>>, vector<1x16x128xbf16>
    %39 = vector.shape_cast %38 : vector<1x16x128xbf16> to vector<16x128xbf16>
    %40 = tpu.concatenate %9, %11, %13, %15, %17, %19, %21, %23, %25, %27, %29, %31, %33, %35, %37, %39 in 1 : vector<16x128xbf16>, vector<16x128xbf16>, vector<16x128xbf16>, vector<16x128xbf16>, vector<16x128xbf16>, vector<16x128xbf16>, vector<16x128xbf16>, vector<16x128xbf16>, vector<16x128xbf16>, vector<16x128xbf16>, vector<16x128xbf16>, vector<16x128xbf16>, vector<16x128xbf16>, vector<16x128xbf16>, vector<16x128xbf16>, vector<16x128xbf16> -> vector<16x2048xbf16>
    %41 = vector.extract_strided_slice %7 {offsets = [0, 0], sizes = [1, 128], strides = [1, 1]} : vector<16x128xf32> to vector<1x128xf32>
    %42 = vector.extract_strided_slice %7 {offsets = [1, 0], sizes = [1, 128], strides = [1, 1]} : vector<16x128xf32> to vector<1x128xf32>
    %43 = vector.extract_strided_slice %7 {offsets = [2, 0], sizes = [1, 128], strides = [1, 1]} : vector<16x128xf32> to vector<1x128xf32>
    %44 = vector.extract_strided_slice %7 {offsets = [3, 0], sizes = [1, 128], strides = [1, 1]} : vector<16x128xf32> to vector<1x128xf32>
    %45 = vector.extract_strided_slice %7 {offsets = [4, 0], sizes = [1, 128], strides = [1, 1]} : vector<16x128xf32> to vector<1x128xf32>
    %46 = vector.extract_strided_slice %7 {offsets = [5, 0], sizes = [1, 128], strides = [1, 1]} : vector<16x128xf32> to vector<1x128xf32>
    %47 = vector.extract_strided_slice %7 {offsets = [6, 0], sizes = [1, 128], strides = [1, 1]} : vector<16x128xf32> to vector<1x128xf32>
    %48 = vector.extract_strided_slice %7 {offsets = [7, 0], sizes = [1, 128], strides = [1, 1]} : vector<16x128xf32> to vector<1x128xf32>
    %49 = vector.extract_strided_slice %7 {offsets = [8, 0], sizes = [1, 128], strides = [1, 1]} : vector<16x128xf32> to vector<1x128xf32>
    %50 = vector.extract_strided_slice %7 {offsets = [9, 0], sizes = [1, 128], strides = [1, 1]} : vector<16x128xf32> to vector<1x128xf32>
    %51 = vector.extract_strided_slice %7 {offsets = [10, 0], sizes = [1, 128], strides = [1, 1]} : vector<16x128xf32> to vector<1x128xf32>
    %52 = vector.extract_strided_slice %7 {offsets = [11, 0], sizes = [1, 128], strides = [1, 1]} : vector<16x128xf32> to vector<1x128xf32>
    %53 = vector.extract_strided_slice %7 {offsets = [12, 0], sizes = [1, 128], strides = [1, 1]} : vector<16x128xf32> to vector<1x128xf32>
    %54 = vector.extract_strided_slice %7 {offsets = [13, 0], sizes = [1, 128], strides = [1, 1]} : vector<16x128xf32> to vector<1x128xf32>
    %55 = vector.extract_strided_slice %7 {offsets = [14, 0], sizes = [1, 128], strides = [1, 1]} : vector<16x128xf32> to vector<1x128xf32>
    %56 = vector.extract_strided_slice %7 {offsets = [15, 0], sizes = [1, 128], strides = [1, 1]} : vector<16x128xf32> to vector<1x128xf32>
    %57 = tpu.concatenate %41, %42, %43, %44, %45, %46, %47, %48, %49, %50, %51, %52, %53, %54, %55, %56 in 1 : vector<1x128xf32>, vector<1x128xf32>, vector<1x128xf32>, vector<1x128xf32>, vector<1x128xf32>, vector<1x128xf32>, vector<1x128xf32>, vector<1x128xf32>, vector<1x128xf32>, vector<1x128xf32>, vector<1x128xf32>, vector<1x128xf32>, vector<1x128xf32>, vector<1x128xf32>, vector<1x128xf32>, vector<1x128xf32> -> vector<1x2048xf32>
    %cst = arith.constant dense<0.000000e+00> : vector<32x2048xf32>
    %58 = tpu.matmul %0, %40, %cst {dimension_numbers = #tpu.dot_dimension_numbers<[1], [0], [0], [1], [0, 0, 1, 1], [], []>} : vector<32x16xbf16>, vector<16x2048xbf16>, vector<32x2048xf32> -> vector<32x2048xf32>
    %cst_46 = arith.constant 0.000000e+00 : f32
    %59 = vector.broadcast %cst_46 : f32 to vector<32x2048xf32>
    %60 = arith.maximumf %58, %59 : vector<32x2048xf32>
    %61 = vector.broadcast %57 : vector<1x2048xf32> to vector<32x2048xf32>
    %62 = arith.mulf %60, %61 : vector<32x2048xf32>
    %63 = vector.extract_strided_slice %62 {offsets = [0, 0], sizes = [32, 128], strides = [1, 1]} : vector<32x2048xf32> to vector<32x128xf32>
    %64 = vector.extract_strided_slice %62 {offsets = [0, 128], sizes = [32, 128], strides = [1, 1]} : vector<32x2048xf32> to vector<32x128xf32>
    %65 = vector.extract_strided_slice %62 {offsets = [0, 256], sizes = [32, 128], strides = [1, 1]} : vector<32x2048xf32> to vector<32x128xf32>
    %66 = vector.extract_strided_slice %62 {offsets = [0, 384], sizes = [32, 128], strides = [1, 1]} : vector<32x2048xf32> to vector<32x128xf32>
    %67 = vector.extract_strided_slice %62 {offsets = [0, 512], sizes = [32, 128], strides = [1, 1]} : vector<32x2048xf32> to vector<32x128xf32>
    %68 = vector.extract_strided_slice %62 {offsets = [0, 640], sizes = [32, 128], strides = [1, 1]} : vector<32x2048xf32> to vector<32x128xf32>
    %69 = vector.extract_strided_slice %62 {offsets = [0, 768], sizes = [32, 128], strides = [1, 1]} : vector<32x2048xf32> to vector<32x128xf32>
    %70 = vector.extract_strided_slice %62 {offsets = [0, 896], sizes = [32, 128], strides = [1, 1]} : vector<32x2048xf32> to vector<32x128xf32>
    %71 = vector.extract_strided_slice %62 {offsets = [0, 1024], sizes = [32, 128], strides = [1, 1]} : vector<32x2048xf32> to vector<32x128xf32>
    %72 = vector.extract_strided_slice %62 {offsets = [0, 1152], sizes = [32, 128], strides = [1, 1]} : vector<32x2048xf32> to vector<32x128xf32>
    %73 = vector.extract_strided_slice %62 {offsets = [0, 1280], sizes = [32, 128], strides = [1, 1]} : vector<32x2048xf32> to vector<32x128xf32>
    %74 = vector.extract_strided_slice %62 {offsets = [0, 1408], sizes = [32, 128], strides = [1, 1]} : vector<32x2048xf32> to vector<32x128xf32>
    %75 = vector.extract_strided_slice %62 {offsets = [0, 1536], sizes = [32, 128], strides = [1, 1]} : vector<32x2048xf32> to vector<32x128xf32>
    %76 = vector.extract_strided_slice %62 {offsets = [0, 1664], sizes = [32, 128], strides = [1, 1]} : vector<32x2048xf32> to vector<32x128xf32>
    %77 = vector.extract_strided_slice %62 {offsets = [0, 1792], sizes = [32, 128], strides = [1, 1]} : vector<32x2048xf32> to vector<32x128xf32>
    %78 = vector.extract_strided_slice %62 {offsets = [0, 1920], sizes = [32, 128], strides = [1, 1]} : vector<32x2048xf32> to vector<32x128xf32>
    %79 = arith.maximumf %63, %64 : vector<32x128xf32>
    %80 = arith.maximumf %65, %66 : vector<32x128xf32>
    %81 = arith.maximumf %67, %68 : vector<32x128xf32>
    %82 = arith.maximumf %69, %70 : vector<32x128xf32>
    %83 = arith.maximumf %71, %72 : vector<32x128xf32>
    %84 = arith.maximumf %73, %74 : vector<32x128xf32>
    %85 = arith.maximumf %75, %76 : vector<32x128xf32>
    %86 = arith.maximumf %77, %78 : vector<32x128xf32>
    %87 = arith.maximumf %79, %80 : vector<32x128xf32>
    %88 = arith.maximumf %81, %82 : vector<32x128xf32>
    %89 = arith.maximumf %83, %84 : vector<32x128xf32>
    %90 = arith.maximumf %85, %86 : vector<32x128xf32>
    %91 = arith.maximumf %87, %88 : vector<32x128xf32>
    %92 = arith.maximumf %89, %90 : vector<32x128xf32>
    %93 = arith.maximumf %91, %92 : vector<32x128xf32>
    %94 = arith.truncf %93 : vector<32x128xf32> to vector<32x128xbf16>
    %cst_47 = arith.constant dense<0.000000e+00> : vector<32x128xf32>
    %95 = tpu.matmul %2, %94, %cst_47 {dimension_numbers = #tpu.dot_dimension_numbers<[1], [0], [0], [1], [0, 0, 1, 1], [], []>} : vector<32x32xbf16>, vector<32x128xbf16>, vector<32x128xf32> -> vector<32x128xf32>
    %96 = arith.truncf %62 : vector<32x2048xf32> to vector<32x2048xbf16>
    %cst_48 = arith.constant dense<0.000000e+00> : vector<32x2048xf32>
    %97 = tpu.matmul %1, %96, %cst_48 {dimension_numbers = #tpu.dot_dimension_numbers<[1], [0], [0], [1], [0, 0, 1, 1], [], []>} : vector<32x32xbf16>, vector<32x2048xbf16>, vector<32x2048xf32> -> vector<32x2048xf32>
    %98 = vector.extract_strided_slice %97 {offsets = [0, 0], sizes = [32, 128], strides = [1, 1]} : vector<32x2048xf32> to vector<32x128xf32>
    %99 = arith.addf %98, %95 : vector<32x128xf32>
    %cst_49 = arith.constant 0.000000e+00 : f32
    %100 = vector.broadcast %cst_49 : f32 to vector<32x128xf32>
    %101 = arith.maximumf %99, %100 : vector<32x128xf32>
    %102 = arith.truncf %101 : vector<32x128xf32> to vector<32x128xbf16>
    %103 = vector.extract_strided_slice %97 {offsets = [0, 128], sizes = [32, 128], strides = [1, 1]} : vector<32x2048xf32> to vector<32x128xf32>
    %104 = arith.addf %103, %95 : vector<32x128xf32>
    %cst_50 = arith.constant 0.000000e+00 : f32
    %105 = vector.broadcast %cst_50 : f32 to vector<32x128xf32>
    %106 = arith.maximumf %104, %105 : vector<32x128xf32>
    %107 = arith.truncf %106 : vector<32x128xf32> to vector<32x128xbf16>
    %108 = vector.extract_strided_slice %97 {offsets = [0, 256], sizes = [32, 128], strides = [1, 1]} : vector<32x2048xf32> to vector<32x128xf32>
    %109 = arith.addf %108, %95 : vector<32x128xf32>
    %cst_51 = arith.constant 0.000000e+00 : f32
    %110 = vector.broadcast %cst_51 : f32 to vector<32x128xf32>
    %111 = arith.maximumf %109, %110 : vector<32x128xf32>
    %112 = arith.truncf %111 : vector<32x128xf32> to vector<32x128xbf16>
    %113 = vector.extract_strided_slice %97 {offsets = [0, 384], sizes = [32, 128], strides = [1, 1]} : vector<32x2048xf32> to vector<32x128xf32>
    %114 = arith.addf %113, %95 : vector<32x128xf32>
    %cst_52 = arith.constant 0.000000e+00 : f32
    %115 = vector.broadcast %cst_52 : f32 to vector<32x128xf32>
    %116 = arith.maximumf %114, %115 : vector<32x128xf32>
    %117 = arith.truncf %116 : vector<32x128xf32> to vector<32x128xbf16>
    %118 = vector.extract_strided_slice %97 {offsets = [0, 512], sizes = [32, 128], strides = [1, 1]} : vector<32x2048xf32> to vector<32x128xf32>
    %119 = arith.addf %118, %95 : vector<32x128xf32>
    %cst_53 = arith.constant 0.000000e+00 : f32
    %120 = vector.broadcast %cst_53 : f32 to vector<32x128xf32>
    %121 = arith.maximumf %119, %120 : vector<32x128xf32>
    %122 = arith.truncf %121 : vector<32x128xf32> to vector<32x128xbf16>
    %123 = vector.extract_strided_slice %97 {offsets = [0, 640], sizes = [32, 128], strides = [1, 1]} : vector<32x2048xf32> to vector<32x128xf32>
    %124 = arith.addf %123, %95 : vector<32x128xf32>
    %cst_54 = arith.constant 0.000000e+00 : f32
    %125 = vector.broadcast %cst_54 : f32 to vector<32x128xf32>
    %126 = arith.maximumf %124, %125 : vector<32x128xf32>
    %127 = arith.truncf %126 : vector<32x128xf32> to vector<32x128xbf16>
    %128 = vector.extract_strided_slice %97 {offsets = [0, 768], sizes = [32, 128], strides = [1, 1]} : vector<32x2048xf32> to vector<32x128xf32>
    %129 = arith.addf %128, %95 : vector<32x128xf32>
    %cst_55 = arith.constant 0.000000e+00 : f32
    %130 = vector.broadcast %cst_55 : f32 to vector<32x128xf32>
    %131 = arith.maximumf %129, %130 : vector<32x128xf32>
    %132 = arith.truncf %131 : vector<32x128xf32> to vector<32x128xbf16>
    %133 = vector.extract_strided_slice %97 {offsets = [0, 896], sizes = [32, 128], strides = [1, 1]} : vector<32x2048xf32> to vector<32x128xf32>
    %134 = arith.addf %133, %95 : vector<32x128xf32>
    %cst_56 = arith.constant 0.000000e+00 : f32
    %135 = vector.broadcast %cst_56 : f32 to vector<32x128xf32>
    %136 = arith.maximumf %134, %135 : vector<32x128xf32>
    %137 = arith.truncf %136 : vector<32x128xf32> to vector<32x128xbf16>
    %138 = vector.extract_strided_slice %97 {offsets = [0, 1024], sizes = [32, 128], strides = [1, 1]} : vector<32x2048xf32> to vector<32x128xf32>
    %139 = arith.addf %138, %95 : vector<32x128xf32>
    %cst_57 = arith.constant 0.000000e+00 : f32
    %140 = vector.broadcast %cst_57 : f32 to vector<32x128xf32>
    %141 = arith.maximumf %139, %140 : vector<32x128xf32>
    %142 = arith.truncf %141 : vector<32x128xf32> to vector<32x128xbf16>
    %143 = vector.extract_strided_slice %97 {offsets = [0, 1152], sizes = [32, 128], strides = [1, 1]} : vector<32x2048xf32> to vector<32x128xf32>
    %144 = arith.addf %143, %95 : vector<32x128xf32>
    %cst_58 = arith.constant 0.000000e+00 : f32
    %145 = vector.broadcast %cst_58 : f32 to vector<32x128xf32>
    %146 = arith.maximumf %144, %145 : vector<32x128xf32>
    %147 = arith.truncf %146 : vector<32x128xf32> to vector<32x128xbf16>
    %148 = vector.extract_strided_slice %97 {offsets = [0, 1280], sizes = [32, 128], strides = [1, 1]} : vector<32x2048xf32> to vector<32x128xf32>
    %149 = arith.addf %148, %95 : vector<32x128xf32>
    %cst_59 = arith.constant 0.000000e+00 : f32
    %150 = vector.broadcast %cst_59 : f32 to vector<32x128xf32>
    %151 = arith.maximumf %149, %150 : vector<32x128xf32>
    %152 = arith.truncf %151 : vector<32x128xf32> to vector<32x128xbf16>
    %153 = vector.extract_strided_slice %97 {offsets = [0, 1408], sizes = [32, 128], strides = [1, 1]} : vector<32x2048xf32> to vector<32x128xf32>
    %154 = arith.addf %153, %95 : vector<32x128xf32>
    %cst_60 = arith.constant 0.000000e+00 : f32
    %155 = vector.broadcast %cst_60 : f32 to vector<32x128xf32>
    %156 = arith.maximumf %154, %155 : vector<32x128xf32>
    %157 = arith.truncf %156 : vector<32x128xf32> to vector<32x128xbf16>
    %158 = vector.extract_strided_slice %97 {offsets = [0, 1536], sizes = [32, 128], strides = [1, 1]} : vector<32x2048xf32> to vector<32x128xf32>
    %159 = arith.addf %158, %95 : vector<32x128xf32>
    %cst_61 = arith.constant 0.000000e+00 : f32
    %160 = vector.broadcast %cst_61 : f32 to vector<32x128xf32>
    %161 = arith.maximumf %159, %160 : vector<32x128xf32>
    %162 = arith.truncf %161 : vector<32x128xf32> to vector<32x128xbf16>
    %163 = vector.extract_strided_slice %97 {offsets = [0, 1664], sizes = [32, 128], strides = [1, 1]} : vector<32x2048xf32> to vector<32x128xf32>
    %164 = arith.addf %163, %95 : vector<32x128xf32>
    %cst_62 = arith.constant 0.000000e+00 : f32
    %165 = vector.broadcast %cst_62 : f32 to vector<32x128xf32>
    %166 = arith.maximumf %164, %165 : vector<32x128xf32>
    %167 = arith.truncf %166 : vector<32x128xf32> to vector<32x128xbf16>
    %168 = vector.extract_strided_slice %97 {offsets = [0, 1792], sizes = [32, 128], strides = [1, 1]} : vector<32x2048xf32> to vector<32x128xf32>
    %169 = arith.addf %168, %95 : vector<32x128xf32>
    %cst_63 = arith.constant 0.000000e+00 : f32
    %170 = vector.broadcast %cst_63 : f32 to vector<32x128xf32>
    %171 = arith.maximumf %169, %170 : vector<32x128xf32>
    %172 = arith.truncf %171 : vector<32x128xf32> to vector<32x128xbf16>
    %173 = vector.extract_strided_slice %97 {offsets = [0, 1920], sizes = [32, 128], strides = [1, 1]} : vector<32x2048xf32> to vector<32x128xf32>
    %174 = arith.addf %173, %95 : vector<32x128xf32>
    %cst_64 = arith.constant 0.000000e+00 : f32
    %175 = vector.broadcast %cst_64 : f32 to vector<32x128xf32>
    %176 = arith.maximumf %174, %175 : vector<32x128xf32>
    %177 = arith.truncf %176 : vector<32x128xf32> to vector<32x128xbf16>
    %178 = tpu.concatenate %102, %107, %112, %117, %122, %127, %132, %137, %142, %147, %152, %157, %162, %167, %172, %177 in 1 : vector<32x128xbf16>, vector<32x128xbf16>, vector<32x128xbf16>, vector<32x128xbf16>, vector<32x128xbf16>, vector<32x128xbf16>, vector<32x128xbf16>, vector<32x128xbf16>, vector<32x128xbf16>, vector<32x128xbf16>, vector<32x128xbf16>, vector<32x128xbf16>, vector<32x128xbf16>, vector<32x128xbf16>, vector<32x128xbf16>, vector<32x128xbf16> -> vector<32x2048xbf16>
    %cst_65 = arith.constant dense<0.000000e+00> : vector<32x2048xf32>
    %179 = tpu.matmul %3, %178, %cst_65 {dimension_numbers = #tpu.dot_dimension_numbers<[1], [0], [0], [1], [0, 0, 1, 1], [], []>} : vector<32x32xbf16>, vector<32x2048xbf16>, vector<32x2048xf32> -> vector<32x2048xf32>
    %cst_66 = arith.constant 0.000000e+00 : f32
    %180 = vector.broadcast %cst_66 : f32 to vector<32x2048xf32>
    %181 = arith.maximumf %179, %180 : vector<32x2048xf32>
    %182 = vector.broadcast %57 : vector<1x2048xf32> to vector<32x2048xf32>
    %183 = arith.mulf %181, %182 : vector<32x2048xf32>
    %184 = vector.extract_strided_slice %183 {offsets = [0, 0], sizes = [32, 128], strides = [1, 1]} : vector<32x2048xf32> to vector<32x128xf32>
    %185 = vector.extract_strided_slice %183 {offsets = [0, 128], sizes = [32, 128], strides = [1, 1]} : vector<32x2048xf32> to vector<32x128xf32>
    %186 = vector.extract_strided_slice %183 {offsets = [0, 256], sizes = [32, 128], strides = [1, 1]} : vector<32x2048xf32> to vector<32x128xf32>
    %187 = vector.extract_strided_slice %183 {offsets = [0, 384], sizes = [32, 128], strides = [1, 1]} : vector<32x2048xf32> to vector<32x128xf32>
    %188 = vector.extract_strided_slice %183 {offsets = [0, 512], sizes = [32, 128], strides = [1, 1]} : vector<32x2048xf32> to vector<32x128xf32>
    %189 = vector.extract_strided_slice %183 {offsets = [0, 640], sizes = [32, 128], strides = [1, 1]} : vector<32x2048xf32> to vector<32x128xf32>
    %190 = vector.extract_strided_slice %183 {offsets = [0, 768], sizes = [32, 128], strides = [1, 1]} : vector<32x2048xf32> to vector<32x128xf32>
    %191 = vector.extract_strided_slice %183 {offsets = [0, 896], sizes = [32, 128], strides = [1, 1]} : vector<32x2048xf32> to vector<32x128xf32>
    %192 = vector.extract_strided_slice %183 {offsets = [0, 1024], sizes = [32, 128], strides = [1, 1]} : vector<32x2048xf32> to vector<32x128xf32>
    %193 = vector.extract_strided_slice %183 {offsets = [0, 1152], sizes = [32, 128], strides = [1, 1]} : vector<32x2048xf32> to vector<32x128xf32>
    %194 = vector.extract_strided_slice %183 {offsets = [0, 1280], sizes = [32, 128], strides = [1, 1]} : vector<32x2048xf32> to vector<32x128xf32>
    %195 = vector.extract_strided_slice %183 {offsets = [0, 1408], sizes = [32, 128], strides = [1, 1]} : vector<32x2048xf32> to vector<32x128xf32>
    %196 = vector.extract_strided_slice %183 {offsets = [0, 1536], sizes = [32, 128], strides = [1, 1]} : vector<32x2048xf32> to vector<32x128xf32>
    %197 = vector.extract_strided_slice %183 {offsets = [0, 1664], sizes = [32, 128], strides = [1, 1]} : vector<32x2048xf32> to vector<32x128xf32>
    %198 = vector.extract_strided_slice %183 {offsets = [0, 1792], sizes = [32, 128], strides = [1, 1]} : vector<32x2048xf32> to vector<32x128xf32>
    %199 = vector.extract_strided_slice %183 {offsets = [0, 1920], sizes = [32, 128], strides = [1, 1]} : vector<32x2048xf32> to vector<32x128xf32>
    %200 = arith.maximumf %184, %185 : vector<32x128xf32>
    %201 = arith.maximumf %186, %187 : vector<32x128xf32>
    %202 = arith.maximumf %188, %189 : vector<32x128xf32>
    %203 = arith.maximumf %190, %191 : vector<32x128xf32>
    %204 = arith.maximumf %192, %193 : vector<32x128xf32>
    %205 = arith.maximumf %194, %195 : vector<32x128xf32>
    %206 = arith.maximumf %196, %197 : vector<32x128xf32>
    %207 = arith.maximumf %198, %199 : vector<32x128xf32>
    %208 = arith.maximumf %200, %201 : vector<32x128xf32>
    %209 = arith.maximumf %202, %203 : vector<32x128xf32>
    %210 = arith.maximumf %204, %205 : vector<32x128xf32>
    %211 = arith.maximumf %206, %207 : vector<32x128xf32>
    %212 = arith.maximumf %208, %209 : vector<32x128xf32>
    %213 = arith.maximumf %210, %211 : vector<32x128xf32>
    %214 = arith.maximumf %212, %213 : vector<32x128xf32>
    %cst_67 = arith.constant dense<0xFF800000> : vector<128xf32>
    %215 = vector.multi_reduction <maximumf>, %7, %cst_67 [0] : vector<16x128xf32> to vector<128xf32>
    %216 = vector.shape_cast %215 : vector<128xf32> to vector<1x128xf32>
    %cst_68 = arith.constant 0.000000e+00 : f32
    %217 = vector.broadcast %cst_68 : f32 to vector<1x128xf32>
    %218 = arith.cmpf ogt, %216, %217 : vector<1x128xf32>
    %219 = arith.truncf %214 : vector<32x128xf32> to vector<32x128xbf16>
    %cst_69 = arith.constant dense<0.000000e+00> : vector<32x128xf32>
    %220 = tpu.matmul %4, %219, %cst_69 {dimension_numbers = #tpu.dot_dimension_numbers<[1], [0], [0], [1], [0, 0, 1, 1], [], []>} : vector<32x32xbf16>, vector<32x128xbf16>, vector<32x128xf32> -> vector<32x128xf32>
    %c0_70 = arith.constant 0 : index
    %c0_71 = arith.constant 0 : index
    %221 = vector.load %arg8[%c0_70, %c0_71] : memref<32x1xf32, #tpu.memory_space<vmem>>, vector<32x1xf32>
    %222 = vector.broadcast %221 : vector<32x1xf32> to vector<32x128xf32>
    %223 = arith.addf %220, %222 : vector<32x128xf32>
    %cst_72 = arith.constant 0.000000e+00 : f32
    %224 = vector.broadcast %cst_72 : f32 to vector<32x128xf32>
    %225 = arith.maximumf %223, %224 : vector<32x128xf32>
    %226 = arith.truncf %225 : vector<32x128xf32> to vector<32x128xbf16>
    %cst_73 = arith.constant dense<0.000000e+00> : vector<32x128xf32>
    %227 = tpu.matmul %5, %226, %cst_73 {dimension_numbers = #tpu.dot_dimension_numbers<[1], [0], [0], [1], [0, 0, 1, 1], [], []>} : vector<32x32xbf16>, vector<32x128xbf16>, vector<32x128xf32> -> vector<32x128xf32>
    %c0_74 = arith.constant 0 : index
    %c0_75 = arith.constant 0 : index
    %228 = vector.load %arg10[%c0_74, %c0_75] : memref<32x1xf32, #tpu.memory_space<vmem>>, vector<32x1xf32>
    %229 = vector.broadcast %228 : vector<32x1xf32> to vector<32x128xf32>
    %230 = arith.addf %227, %229 : vector<32x128xf32>
    %cst_76 = arith.constant 0.000000e+00 : f32
    %231 = vector.shape_cast %218 : vector<1x128xi1> to vector<1x128xi1>
    %232 = vector.broadcast %231 : vector<1x128xi1> to vector<32x128xi1>
    %233 = vector.broadcast %cst_76 : f32 to vector<32x128xf32>
    %234 = arith.select %232, %230, %233 : vector<32x128xi1>, vector<32x128xf32>
    %c0_77 = arith.constant 0 : index
    %c0_78 = arith.constant 0 : index
    %235 = vector.load %arg11[%c0_77, %c0_78] : memref<32x128xf32, #tpu.memory_space<vmem>>, vector<32x128xf32>
    tpu.vector_store %arg11[%c0_77, %c0_78], %234 {strides = array<i32>} : memref<32x128xf32, #tpu.memory_space<vmem>>, vector<32x128xf32>,
    return
  }
  func.func @transform_0(%arg0: i32) -> (i32, i32, i32) {
    %c0_i32 = arith.constant 0 : i32
    %c0_i32_0 = arith.constant 0 : i32
    %c0_i32_1 = arith.constant 0 : i32
    return %c0_i32, %c0_i32_0, %arg0 : i32, i32, i32
  }
  func.func @transform_1(%arg0: i32) -> (i32, i32) {
    %c0_i32 = arith.constant 0 : i32
    %c0_i32_0 = arith.constant 0 : i32
    return %c0_i32, %arg0 : i32, i32
  }
  func.func @transform_2(%arg0: i32) -> (i32, i32) {
    %c0_i32 = arith.constant 0 : i32
    %c0_i32_0 = arith.constant 0 : i32
    %c0_i32_1 = arith.constant 0 : i32
    return %c0_i32, %c0_i32_0 : i32, i32
  }
  func.func @transform_3(%arg0: i32) -> (i32, i32) {
    %c0_i32 = arith.constant 0 : i32
    %c0_i32_0 = arith.constant 0 : i32
    %c0_i32_1 = arith.constant 0 : i32
    return %c0_i32, %c0_i32_0 : i32, i32
  }
  func.func @transform_4(%arg0: i32) -> (i32, i32) {
    %c0_i32 = arith.constant 0 : i32
    %c0_i32_0 = arith.constant 0 : i32
    %c0_i32_1 = arith.constant 0 : i32
    return %c0_i32, %c0_i32_0 : i32, i32
  }
  func.func @transform_5(%arg0: i32) -> (i32, i32) {
    %c0_i32 = arith.constant 0 : i32
    %c0_i32_0 = arith.constant 0 : i32
    %c0_i32_1 = arith.constant 0 : i32
    return %c0_i32, %c0_i32_0 : i32, i32
  }
  func.func @transform_6(%arg0: i32) -> (i32, i32) {
    %c0_i32 = arith.constant 0 : i32
    %c0_i32_0 = arith.constant 0 : i32
    %c0_i32_1 = arith.constant 0 : i32
    return %c0_i32, %c0_i32_0 : i32, i32
  }
  func.func @transform_7(%arg0: i32) -> (i32, i32) {
    %c0_i32 = arith.constant 0 : i32
    %c0_i32_0 = arith.constant 0 : i32
    %c0_i32_1 = arith.constant 0 : i32
    return %c0_i32, %c0_i32_0 : i32, i32
  }
  func.func @transform_8(%arg0: i32) -> (i32, i32) {
    %c0_i32 = arith.constant 0 : i32
    %c0_i32_0 = arith.constant 0 : i32
    %c0_i32_1 = arith.constant 0 : i32
    return %c0_i32, %c0_i32_0 : i32, i32
  }
  func.func @transform_9(%arg0: i32) -> (i32, i32) {
    %c0_i32 = arith.constant 0 : i32
    %c0_i32_0 = arith.constant 0 : i32
    %c0_i32_1 = arith.constant 0 : i32
    return %c0_i32, %c0_i32_0 : i32, i32
  }
  func.func @transform_10(%arg0: i32) -> (i32, i32) {
    %c0_i32 = arith.constant 0 : i32
    %c0_i32_0 = arith.constant 0 : i32
    return %c0_i32, %arg0 : i32, i32
  }
}

</mosaic_0001>

<llo_original>
// kernel: tpu_custom_call.1
$region0: #{tpu_custom_call.1}
  #allocation0 [shape = 'u32[]', space=smem, size = 0x4, offset = 0x4, fixed_abs, tag = 'smem constant byte address 0x4 - core index']
  #allocation1 [shape = 'u32[144,128]{1,0:T(1,128)}', space=vmem, size = 0x12000, scoped, tag = 'internal scratch']
  %s0 = inlined_call_operand.hbm [shape: bf16[16,16,128], index: 0, kind: input, shape index: {}]
  %s1 = inlined_call_operand.vmem [shape: bf16[16,128], index: 1, kind: input, shape index: {}]
  %s2 = inlined_call_operand.vmem [shape: bf16[32,16], index: 2, kind: input, shape index: {}]
  %s3 = inlined_call_operand.vmem [shape: bf16[32,32], index: 3, kind: input, shape index: {}]
  %s4 = inlined_call_operand.vmem [shape: bf16[32,32], index: 4, kind: input, shape index: {}]
  %s5 = inlined_call_operand.vmem [shape: bf16[32,32], index: 5, kind: input, shape index: {}]
  %s6 = inlined_call_operand.vmem [shape: bf16[32,32], index: 6, kind: input, shape index: {}]
  %s7 = inlined_call_operand.vmem [shape: f32[32,1], index: 7, kind: input, shape index: {}]
  %s8 = inlined_call_operand.vmem [shape: bf16[32,32], index: 8, kind: input, shape index: {}]
  %s9 = inlined_call_operand.vmem [shape: f32[32,1], index: 9, kind: input, shape index: {}]
  %s10 = inlined_call_operand.hbm [shape: f32[32,128], index: 10, kind: output, shape index: {}]
  %s11 = sld [smem:[#allocation0]]
  $region54: #{tpu_custom_call.1} parent=0
    _
  %s13 = ssub.s32 1, %s11
  %s14 = scalar_select 0, %s13, %s11
  $region1: #{tpu_custom_call.1} parent=0
    #allocation2 [shape = 'u8[65536]{0}', space=vmem, size = 0x10000, scoped, tag = 'input window, operand 0, single buffered']
    #allocation3 [shape = 's32[1]{0}', space=sflag, size = 0x4, scoped, tag = 'scoped memory for tpu_custom_call.1']
    #allocation4 [shape = 's32[1]{0}', space=sflag, size = 0x4, scoped, tag = 'scoped memory for tpu_custom_call.1']
    #allocation5 [shape = 'u8[16384]{0}', space=vmem, size = 0x4000, scoped, tag = 'output window, operand 0, single buffered']
    %15 = vsyncpa [#allocation3], 0
    %16 = vsyncpa [#allocation4], 0
    // Predicated region
    $region2: #{tpu_custom_call.1} parent=1 // pred_check
      _
    $region3: #{tpu_custom_call.1} parent=1 // pred_check_branch
      %18 = sbr.rel (0) target = $region5
    $region4: #{tpu_custom_call.1} parent=1 // pred_region
      %s20 = ssub.s32 2048, 2048
      %21 = vsyncadd [#allocation3], %s20
      %s22 = sshll.u32 [#allocation2], 4
      %s23 = int_to_ptr.vmem [resolvable:$true] %s22
      %28 = dma.hbm_to_vmem [thread:$0]  %s0, 2048, %s23, [#allocation3], 64, 64, 4
    $region5: #{tpu_custom_call.1} parent=1 // pred_fallthru
      _
    // Predicated region
    $region6: #{tpu_custom_call.1} parent=1 // pred_check
      _
    $region7: #{tpu_custom_call.1} parent=1 // pred_check_branch
      %30 = sbr.rel (0) target = $region9
    $region8: #{tpu_custom_call.1} parent=1 // pred_region
      _
    $region9: #{tpu_custom_call.1} parent=1 // pred_fallthru
      _
    // Predicated region
    $region10: #{tpu_custom_call.1} parent=1 // pred_check
      _
    $region11: #{tpu_custom_call.1} parent=1 // pred_check_branch
      %32 = sbr.rel (0) target = $region13
    $region12: #{tpu_custom_call.1} parent=1 // pred_region
      _
    $region13: #{tpu_custom_call.1} parent=1 // pred_fallthru
      _
    // Predicated region
    $region14: #{tpu_custom_call.1} parent=1 // pred_check
      _
    $region15: #{tpu_custom_call.1} parent=1 // pred_check_branch
      %34 = sbr.rel (0) target = $region17
    $region16: #{tpu_custom_call.1} parent=1 // pred_region
      _
    $region17: #{tpu_custom_call.1} parent=1 // pred_fallthru
      _
    // Predicated region
    $region18: #{tpu_custom_call.1} parent=1 // pred_check
      _
    $region19: #{tpu_custom_call.1} parent=1 // pred_check_branch
      %36 = sbr.rel (0) target = $region21
    $region20: #{tpu_custom_call.1} parent=1 // pred_region
      _
    $region21: #{tpu_custom_call.1} parent=1 // pred_fallthru
      _
    // Predicated region
    $region22: #{tpu_custom_call.1} parent=1 // pred_check
      _
    $region23: #{tpu_custom_call.1} parent=1 // pred_check_branch
      %38 = sbr.rel (0) target = $region25
    $region24: #{tpu_custom_call.1} parent=1 // pred_region
      _
    $region25: #{tpu_custom_call.1} parent=1 // pred_fallthru
      _
    // Predicated region
    $region26: #{tpu_custom_call.1} parent=1 // pred_check
      _
    $region27: #{tpu_custom_call.1} parent=1 // pred_check_branch
      %40 = sbr.rel (0) target = $region29
    $region28: #{tpu_custom_call.1} parent=1 // pred_region
      _
    $region29: #{tpu_custom_call.1} parent=1 // pred_fallthru
      _
    // Predicated region
    $region30: #{tpu_custom_call.1} parent=1 // pred_check
      _
    $region31: #{tpu_custom_call.1} parent=1 // pred_check_branch
      %42 = sbr.rel (0) target = $region33
    $region32: #{tpu_custom_call.1} parent=1 // pred_region
      _
    $region33: #{tpu_custom_call.1} parent=1 // pred_fallthru
      _
    // Predicated region
    $region34: #{tpu_custom_call.1} parent=1 // pred_check
      _
    $region35: #{tpu_custom_call.1} parent=1 // pred_check_branch
      %44 = sbr.rel (0) target = $region37
    $region36: #{tpu_custom_call.1} parent=1 // pred_region
      _
    $region37: #{tpu_custom_call.1} parent=1 // pred_fallthru
      _
    // Predicated region
    $region38: #{tpu_custom_call.1} parent=1 // pred_check
      _
    $region39: #{tpu_custom_call.1} parent=1 // pred_check_branch
      %46 = sbr.rel (0) target = $region41
    $region40: #{tpu_custom_call.1} parent=1 // pred_region
      _
    $region41: #{tpu_custom_call.1} parent=1 // pred_fallthru
      _
    // Predicated region
    $region42: #{tpu_custom_call.1} parent=1 // pred_check
      _
    $region43: #{tpu_custom_call.1} parent=1 // pred_check_branch
      %48 = sbr.rel (0) target = $region45
    $region44: #{tpu_custom_call.1} parent=1 // pred_region
      %49 = dma.done [#allocation3], 2048
    $region45: #{tpu_custom_call.1} parent=1 // pred_fallthru
      _
    %v51 = vld [vmem:[%s2] sm:$0xf]
    %v52 = vld [vmem:[%s2 + $0x4] sm:$0xf]
    %v53 = vld [vmem:[%s2 + $0x8] sm:$0xf]
    %v54 = vld [vmem:[%s2 + $0xc] sm:$0xf]
    %v55 = vld [vmem:[%s3] sm:$0xf]
    %v56 = vld [vmem:[%s3 + $0x4] sm:$0xf]
    %v57 = vld [vmem:[%s3 + $0x8] sm:$0xf]
    %v58 = vld [vmem:[%s3 + $0xc] sm:$0xf]
    %v59 = vld [vmem:[%s4] sm:$0xf]
    %v60 = vld [vmem:[%s4 + $0x4] sm:$0xf]
    %v61 = vld [vmem:[%s4 + $0x8] sm:$0xf]
    %v62 = vld [vmem:[%s4 + $0xc] sm:$0xf]
    %v63 = vld [vmem:[%s5] sm:$0xf]
    %v64 = vld [vmem:[%s5 + $0x4] sm:$0xf]
    %v65 = vld [vmem:[%s5 + $0x8] sm:$0xf]
    %v66 = vld [vmem:[%s5 + $0xc] sm:$0xf]
    %v67 = vld [vmem:[%s6] sm:$0xf]
    %v68 = vld [vmem:[%s6 + $0x4] sm:$0xf]
    %v69 = vld [vmem:[%s6 + $0x8] sm:$0xf]
    %v70 = vld [vmem:[%s6 + $0xc] sm:$0xf]
    %v71 = vld [vmem:[%s8] sm:$0xf]
    %v72 = vld [vmem:[%s8 + $0x4] sm:$0xf]
    %v73 = vld [vmem:[%s8 + $0x8] sm:$0xf]
    %v74 = vld [vmem:[%s8 + $0xc] sm:$0xf]
    %v75 = vld [vmem:[%s1] sm:$0xf]
    %v76 = vld [vmem:[%s1 + $0x4] sm:$0xf]
    %v77 = vunpack.c.l.bf16 %v75
    %v78 = vunpack.c.l.bf16 %v76
    %v79 = vld [vmem:[#allocation2] sm:$0xf]
    %v80 = vld [vmem:[#allocation2 + $0x4] sm:$0xf]
    %s81 = scalar_lea.vmem [#allocation2], 8
    %v82 = vld [vmem:[%s81] sm:$0xf]
    %v83 = vld [vmem:[%s81 + $0x4] sm:$0xf]
    %s84 = scalar_lea.vmem [#allocation2], 16
    %v85 = vld [vmem:[%s84] sm:$0xf]
    %v86 = vld [vmem:[%s84 + $0x4] sm:$0xf]
    %s87 = scalar_lea.vmem [#allocation2], 24
    %v88 = vld [vmem:[%s87] sm:$0xf]
    %v89 = vld [vmem:[%s87 + $0x4] sm:$0xf]
    %s90 = scalar_lea.vmem [#allocation2], 32
    %v91 = vld [vmem:[%s90] sm:$0xf]
    %v92 = vld [vmem:[%s90 + $0x4] sm:$0xf]
    %s93 = scalar_lea.vmem [#allocation2], 40
    %v94 = vld [vmem:[%s93] sm:$0xf]
    %v95 = vld [vmem:[%s93 + $0x4] sm:$0xf]
    %s96 = scalar_lea.vmem [#allocation2], 48
    %v97 = vld [vmem:[%s96] sm:$0xf]
    %v98 = vld [vmem:[%s96 + $0x4] sm:$0xf]
    %s99 = scalar_lea.vmem [#allocation2], 56
    %v100 = vld [vmem:[%s99] sm:$0xf]
    %v101 = vld [vmem:[%s99 + $0x4] sm:$0xf]
    %s102 = scalar_lea.vmem [#allocation2], 64
    %v103 = vld [vmem:[%s102] sm:$0xf]
    %v104 = vld [vmem:[%s102 + $0x4] sm:$0xf]
    %s105 = scalar_lea.vmem [#allocation2], 72
    %v106 = vld [vmem:[%s105] sm:$0xf]
    %v107 = vld [vmem:[%s105 + $0x4] sm:$0xf]
    %s108 = scalar_lea.vmem [#allocation2], 80
    %v109 = vld [vmem:[%s108] sm:$0xf]
    %v110 = vld [vmem:[%s108 + $0x4] sm:$0xf]
    %s111 = scalar_lea.vmem [#allocation2], 88
    %v112 = vld [vmem:[%s111] sm:$0xf]
    %v113 = vld [vmem:[%s111 + $0x4] sm:$0xf]
    %s114 = scalar_lea.vmem [#allocation2], 96
    %v115 = vld [vmem:[%s114] sm:$0xf]
    %v116 = vld [vmem:[%s114 + $0x4] sm:$0xf]
    %s117 = scalar_lea.vmem [#allocation2], 104
    %v118 = vld [vmem:[%s117] sm:$0xf]
    %v119 = vld [vmem:[%s117 + $0x4] sm:$0xf]
    %s120 = scalar_lea.vmem [#allocation2], 112
    %v121 = vld [vmem:[%s120] sm:$0xf]
    %v122 = vld [vmem:[%s120 + $0x4] sm:$0xf]
    %s123 = scalar_lea.vmem [#allocation2], 120
    %v124 = vld [vmem:[%s123] sm:$0xf]
    %v125 = vld [vmem:[%s123 + $0x4] sm:$0xf]
    %v128 = vunpack.c.l.b16 %v79
    %v129 = vunpack.c.l.b16 %v80
    %v130 = vpack.c.b16 %v129, %v128
    %v134 = vunpack.c.l.b16 %v82
    %v135 = vunpack.c.l.b16 %v83
    %v136 = vpack.c.b16 %v135, %v134
    %v140 = vunpack.c.l.b16 %v85
    %v141 = vunpack.c.l.b16 %v86
    %v142 = vpack.c.b16 %v141, %v140
    %v146 = vunpack.c.l.b16 %v88
    %v147 = vunpack.c.l.b16 %v89
    %v148 = vpack.c.b16 %v147, %v146
    %v152 = vunpack.c.l.b16 %v91
    %v153 = vunpack.c.l.b16 %v92
    %v154 = vpack.c.b16 %v153, %v152
    %v158 = vunpack.c.l.b16 %v94
    %v159 = vunpack.c.l.b16 %v95
    %v160 = vpack.c.b16 %v159, %v158
    %v164 = vunpack.c.l.b16 %v97
    %v165 = vunpack.c.l.b16 %v98
    %v166 = vpack.c.b16 %v165, %v164
    %v170 = vunpack.c.l.b16 %v100
    %v171 = vunpack.c.l.b16 %v101
    %v172 = vpack.c.b16 %v171, %v170
    %v176 = vunpack.c.l.b16 %v103
    %v177 = vunpack.c.l.b16 %v104
    %v178 = vpack.c.b16 %v177, %v176
    %v182 = vunpack.c.l.b16 %v106
    %v183 = vunpack.c.l.b16 %v107
    %v184 = vpack.c.b16 %v183, %v182
    %v188 = vunpack.c.l.b16 %v109
    %v189 = vunpack.c.l.b16 %v110
    %v190 = vpack.c.b16 %v189, %v188
    %v194 = vunpack.c.l.b16 %v112
    %v195 = vunpack.c.l.b16 %v113
    %v196 = vpack.c.b16 %v195, %v194
    %v200 = vunpack.c.l.b16 %v115
    %v201 = vunpack.c.l.b16 %v116
    %v202 = vpack.c.b16 %v201, %v200
    %v206 = vunpack.c.l.b16 %v118
    %v207 = vunpack.c.l.b16 %v119
    %v208 = vpack.c.b16 %v207, %v206
    %v212 = vunpack.c.l.b16 %v121
    %v213 = vunpack.c.l.b16 %v122
    %v214 = vpack.c.b16 %v213, %v212
    %v218 = vunpack.c.l.b16 %v124
    %v219 = vunpack.c.l.b16 %v125
    %v220 = vpack.c.b16 %v219, %v218
    %v223 = vrot.slane %v77, 1
    %v225 = vrot.slane %v77, 2
    %v227 = vrot.slane %v77, 3
    %v229 = vrot.slane %v77, 4
    %v231 = vrot.slane %v77, 5
    %v233 = vrot.slane %v77, 6
    %v235 = vrot.slane %v77, 7
    %v238 = vrot.slane %v78, 1
    %v240 = vrot.slane %v78, 2
    %v242 = vrot.slane %v78, 3
    %v244 = vrot.slane %v78, 4
    %v246 = vrot.slane %v78, 5
    %v248 = vrot.slane %v78, 6
    %v250 = vrot.slane %v78, 7
    %v256 = vunpack.c.l.b16 %v51
    %v257 = vunpack.c.l.b16 %v52
    %v258 = vunpack.c.l.b16 %v53
    %v259 = vunpack.c.l.b16 %v54
    %v260 = vpack.c.b16 %v257, %v256
    %v261 = vpack.c.b16 %v259, %v258
    %vm262 = vcmask 130048
    %v264 = vsel %vm262, %v260, 0
    %v267 = vsel %vm262, %v261, 0
    %269 = vmatprep.subr.bf16.mxu0 0
    %270 = vmatpush1.bf16.msra.mxu0 0
    %271 = vmatprep.subr.bf16.mxu0 0
    %272 = vmatpush1.bf16.msra.mxu0 0
    %273 = vmatprep.subr.bf16.mxu0 0
    %274 = vmatpush1.bf16.msra.mxu0 0
    %275 = vmatprep.subr.bf16.mxu0 0
    %276 = vmatpush1.bf16.msra.mxu0 0
    %277 = vmatprep.subr.bf16.mxu0 0
    %278 = vmatpush1.bf16.msra.mxu0 0
    %279 = vmatprep.subr.bf16.mxu0 0
    %280 = vmatpush1.bf16.msra.mxu0 0
    %281 = vmatprep.subr.bf16.mxu0 0
    %282 = vmatpush1.bf16.msra.mxu0 0
    %283 = vmatprep.subr.bf16.mxu0 %v136
    %284 = vmatpush1.bf16.msra.mxu0 %v130
    %285 = vmatprep.subr.bf16.mxu0 0
    %286 = vmatpush2.bf16.msra.mxu0 0
    %287 = vmatprep.subr.bf16.mxu0 0
    %288 = vmatpush2.bf16.msra.mxu0 0
    %289 = vmatprep.subr.bf16.mxu0 0
    %290 = vmatpush2.bf16.msra.mxu0 0
    %291 = vmatprep.subr.bf16.mxu0 0
    %292 = vmatpush2.bf16.msra.mxu0 0
    %293 = vmatprep.subr.bf16.mxu0 0
    %294 = vmatpush2.bf16.msra.mxu0 0
    %295 = vmatprep.subr.bf16.mxu0 0
    %296 = vmatpush2.bf16.msra.mxu0 0
    %297 = vmatprep.subr.bf16.mxu0 0
    %298 = vmatpush2.bf16.msra.mxu0 0
    %299 = vmatprep.subr.bf16.mxu0 0
    %300 = vmatpush2.bf16.msra.mxu0 0
    %301 = vmatprep.mubr.bf16.mxu0 0
    %302 = vmatmul.mubr.bf16.gmra.mxu0 %v264
    %v303 = vpop.f32.mrf.mxu0
    %v304 = vadd.f32 0.0, %v303
    %v305 = vpop.f32.mrf.mxu0
    %v306 = vadd.f32 0.0, %v305
    %v307 = vpop.f32.mrf.mxu0
    %v308 = vadd.f32 0.0, %v307
    %v309 = vpop.f32.mrf.mxu0
    %v310 = vadd.f32 0.0, %v309
    %311 = vmatprep.mubr.bf16.mxu0 0
    %312 = vmatmul.mubr.bf16.gmra.mxu0 %v267
    %v313 = vpop.f32.mrf.mxu0
    %v314 = vadd.f32 0.0, %v313
    %v315 = vpop.f32.mrf.mxu0
    %v316 = vadd.f32 0.0, %v315
    %v317 = vpop.f32.mrf.mxu0
    %v318 = vadd.f32 0.0, %v317
    %v319 = vpop.f32.mrf.mxu0
    %v320 = vadd.f32 0.0, %v319
    %321 = vdwg.mxu0
    %322 = vmatprep.subr.bf16.mxu0 0
    %323 = vmatpush1.bf16.msra.mxu0 0
    %324 = vmatprep.subr.bf16.mxu0 0
    %325 = vmatpush1.bf16.msra.mxu0 0
    %326 = vmatprep.subr.bf16.mxu0 0
    %327 = vmatpush1.bf16.msra.mxu0 0
    %328 = vmatprep.subr.bf16.mxu0 0
    %329 = vmatpush1.bf16.msra.mxu0 0
    %330 = vmatprep.subr.bf16.mxu0 0
    %331 = vmatpush1.bf16.msra.mxu0 0
    %332 = vmatprep.subr.bf16.mxu0 0
    %333 = vmatpush1.bf16.msra.mxu0 0
    %334 = vmatprep.subr.bf16.mxu0 0
    %335 = vmatpush1.bf16.msra.mxu0 0
    %336 = vmatprep.subr.bf16.mxu0 %v148
    %337 = vmatpush1.bf16.msra.mxu0 %v142
    %338 = vmatprep.subr.bf16.mxu0 0
    %339 = vmatpush2.bf16.msra.mxu0 0
    %340 = vmatprep.subr.bf16.mxu0 0
    %341 = vmatpush2.bf16.msra.mxu0 0
    %342 = vmatprep.subr.bf16.mxu0 0
    %343 = vmatpush2.bf16.msra.mxu0 0
    %344 = vmatprep.subr.bf16.mxu0 0
    %345 = vmatpush2.bf16.msra.mxu0 0
    %346 = vmatprep.subr.bf16.mxu0 0
    %347 = vmatpush2.bf16.msra.mxu0 0
    %348 = vmatprep.subr.bf16.mxu0 0
    %349 = vmatpush2.bf16.msra.mxu0 0
    %350 = vmatprep.subr.bf16.mxu0 0
    %351 = vmatpush2.bf16.msra.mxu0 0
    %352 = vmatprep.subr.bf16.mxu0 0
    %353 = vmatpush2.bf16.msra.mxu0 0
    %354 = vmatprep.mubr.bf16.mxu0 0
    %355 = vmatmul.mubr.bf16.gmra.mxu0 %v264
    %v356 = vpop.f32.mrf.mxu0
    %v357 = vadd.f32 0.0, %v356
    %v358 = vpop.f32.mrf.mxu0
    %v359 = vadd.f32 0.0, %v358
    %v360 = vpop.f32.mrf.mxu0
    %v361 = vadd.f32 0.0, %v360
    %v362 = vpop.f32.mrf.mxu0
    %v363 = vadd.f32 0.0, %v362
    %364 = vmatprep.mubr.bf16.mxu0 0
    %365 = vmatmul.mubr.bf16.gmra.mxu0 %v267
    %v366 = vpop.f32.mrf.mxu0
    %v367 = vadd.f32 0.0, %v366
    %v368 = vpop.f32.mrf.mxu0
    %v369 = vadd.f32 0.0, %v368
    %v370 = vpop.f32.mrf.mxu0
    %v371 = vadd.f32 0.0, %v370
    %v372 = vpop.f32.mrf.mxu0
    %v373 = vadd.f32 0.0, %v372
    %374 = vdwg.mxu0
    %375 = vmatprep.subr.bf16.mxu0 0
    %376 = vmatpush1.bf16.msra.mxu0 0
    %377 = vmatprep.subr.bf16.mxu0 0
    %378 = vmatpush1.bf16.msra.mxu0 0
    %379 = vmatprep.subr.bf16.mxu0 0
    %380 = vmatpush1.bf16.msra.mxu0 0
    %381 = vmatprep.subr.bf16.mxu0 0
    %382 = vmatpush1.bf16.msra.mxu0 0
    %383 = vmatprep.subr.bf16.mxu0 0
    %384 = vmatpush1.bf16.msra.mxu0 0
    %385 = vmatprep.subr.bf16.mxu0 0
    %386 = vmatpush1.bf16.msra.mxu0 0
    %387 = vmatprep.subr.bf16.mxu0 0
    %388 = vmatpush1.bf16.msra.mxu0 0
    %389 = vmatprep.subr.bf16.mxu0 %v160
    %390 = vmatpush1.bf16.msra.mxu0 %v154
    %391 = vmatprep.subr.bf16.mxu0 0
    %392 = vmatpush2.bf16.msra.mxu0 0
    %393 = vmatprep.subr.bf16.mxu0 0
    %394 = vmatpush2.bf16.msra.mxu0 0
    %395 = vmatprep.subr.bf16.mxu0 0
    %396 = vmatpush2.bf16.msra.mxu0 0
    %397 = vmatprep.subr.bf16.mxu0 0
    %398 = vmatpush2.bf16.msra.mxu0 0
    %399 = vmatprep.subr.bf16.mxu0 0
    %400 = vmatpush2.bf16.msra.mxu0 0
    %401 = vmatprep.subr.bf16.mxu0 0
    %402 = vmatpush2.bf16.msra.mxu0 0
    %403 = vmatprep.subr.bf16.mxu0 0
    %404 = vmatpush2.bf16.msra.mxu0 0
    %405 = vmatprep.subr.bf16.mxu0 0
    %406 = vmatpush2.bf16.msra.mxu0 0
    %407 = vmatprep.mubr.bf16.mxu0 0
    %408 = vmatmul.mubr.bf16.gmra.mxu0 %v264
    %v409 = vpop.f32.mrf.mxu0
    %v410 = vadd.f32 0.0, %v409
    %v411 = vpop.f32.mrf.mxu0
    %v412 = vadd.f32 0.0, %v411
    %v413 = vpop.f32.mrf.mxu0
    %v414 = vadd.f32 0.0, %v413
    %v415 = vpop.f32.mrf.mxu0
    %v416 = vadd.f32 0.0, %v415
    %417 = vmatprep.mubr.bf16.mxu0 0
    %418 = vmatmul.mubr.bf16.gmra.mxu0 %v267
    %v419 = vpop.f32.mrf.mxu0
    %v420 = vadd.f32 0.0, %v419
    %v421 = vpop.f32.mrf.mxu0
    %v422 = vadd.f32 0.0, %v421
    %v423 = vpop.f32.mrf.mxu0
    %v424 = vadd.f32 0.0, %v423
    %v425 = vpop.f32.mrf.mxu0
    %v426 = vadd.f32 0.0, %v425
    %427 = vdwg.mxu0
    %428 = vmatprep.subr.bf16.mxu0 0
    %429 = vmatpush1.bf16.msra.mxu0 0
    %430 = vmatprep.subr.bf16.mxu0 0
    %431 = vmatpush1.bf16.msra.mxu0 0
    %432 = vmatprep.subr.bf16.mxu0 0
    %433 = vmatpush1.bf16.msra.mxu0 0
    %434 = vmatprep.subr.bf16.mxu0 0
    %435 = vmatpush1.bf16.msra.mxu0 0
    %436 = vmatprep.subr.bf16.mxu0 0
    %437 = vmatpush1.bf16.msra.mxu0 0
    %438 = vmatprep.subr.bf16.mxu0 0
    %439 = vmatpush1.bf16.msra.mxu0 0
    %440 = vmatprep.subr.bf16.mxu0 0
    %441 = vmatpush1.bf16.msra.mxu0 0
    %442 = vmatprep.subr.bf16.mxu0 %v172
    %443 = vmatpush1.bf16.msra.mxu0 %v166
    %444 = vmatprep.subr.bf16.mxu0 0
    %445 = vmatpush2.bf16.msra.mxu0 0
    %446 = vmatprep.subr.bf16.mxu0 0
    %447 = vmatpush2.bf16.msra.mxu0 0
    %448 = vmatprep.subr.bf16.mxu0 0
    %449 = vmatpush2.bf16.msra.mxu0 0
    %450 = vmatprep.subr.bf16.mxu0 0
    %451 = vmatpush2.bf16.msra.mxu0 0
    %452 = vmatprep.subr.bf16.mxu0 0
    %453 = vmatpush2.bf16.msra.mxu0 0
    %454 = vmatprep.subr.bf16.mxu0 0
    %455 = vmatpush2.bf16.msra.mxu0 0
    %456 = vmatprep.subr.bf16.mxu0 0
    %457 = vmatpush2.bf16.msra.mxu0 0
    %458 = vmatprep.subr.bf16.mxu0 0
    %459 = vmatpush2.bf16.msra.mxu0 0
    %460 = vmatprep.mubr.bf16.mxu0 0
    %461 = vmatmul.mubr.bf16.gmra.mxu0 %v264
    %v462 = vpop.f32.mrf.mxu0
    %v463 = vadd.f32 0.0, %v462
    %v464 = vpop.f32.mrf.mxu0
    %v465 = vadd.f32 0.0, %v464
    %v466 = vpop.f32.mrf.mxu0
    %v467 = vadd.f32 0.0, %v466
    %v468 = vpop.f32.mrf.mxu0
    %v469 = vadd.f32 0.0, %v468
    %470 = vmatprep.mubr.bf16.mxu0 0
    %471 = vmatmul.mubr.bf16.gmra.mxu0 %v267
    %v472 = vpop.f32.mrf.mxu0
    %v473 = vadd.f32 0.0, %v472
    %v474 = vpop.f32.mrf.mxu0
    %v475 = vadd.f32 0.0, %v474
    %v476 = vpop.f32.mrf.mxu0
    %v477 = vadd.f32 0.0, %v476
    %v478 = vpop.f32.mrf.mxu0
    %v479 = vadd.f32 0.0, %v478
    %480 = vdwg.mxu0
    %481 = vmatprep.subr.bf16.mxu0 0
    %482 = vmatpush1.bf16.msra.mxu0 0
    %483 = vmatprep.subr.bf16.mxu0 0
    %484 = vmatpush1.bf16.msra.mxu0 0
    %485 = vmatprep.subr.bf16.mxu0 0
    %486 = vmatpush1.bf16.msra.mxu0 0
    %487 = vmatprep.subr.bf16.mxu0 0
    %488 = vmatpush1.bf16.msra.mxu0 0
    %489 = vmatprep.subr.bf16.mxu0 0
    %490 = vmatpush1.bf16.msra.mxu0 0
    %491 = vmatprep.subr.bf16.mxu0 0
    %492 = vmatpush1.bf16.msra.mxu0 0
    %493 = vmatprep.subr.bf16.mxu0 0
    %494 = vmatpush1.bf16.msra.mxu0 0
    %495 = vmatprep.subr.bf16.mxu0 %v184
    %496 = vmatpush1.bf16.msra.mxu0 %v178
    %497 = vmatprep.subr.bf16.mxu0 0
    %498 = vmatpush2.bf16.msra.mxu0 0
    %499 = vmatprep.subr.bf16.mxu0 0
    %500 = vmatpush2.bf16.msra.mxu0 0
    %501 = vmatprep.subr.bf16.mxu0 0
    %502 = vmatpush2.bf16.msra.mxu0 0
    %503 = vmatprep.subr.bf16.mxu0 0
    %504 = vmatpush2.bf16.msra.mxu0 0
    %505 = vmatprep.subr.bf16.mxu0 0
    %506 = vmatpush2.bf16.msra.mxu0 0
    %507 = vmatprep.subr.bf16.mxu0 0
    %508 = vmatpush2.bf16.msra.mxu0 0
    %509 = vmatprep.subr.bf16.mxu0 0
    %510 = vmatpush2.bf16.msra.mxu0 0
    %511 = vmatprep.subr.bf16.mxu0 0
    %512 = vmatpush2.bf16.msra.mxu0 0
    %513 = vmatprep.mubr.bf16.mxu0 0
    %514 = vmatmul.mubr.bf16.gmra.mxu0 %v264
    %v515 = vpop.f32.mrf.mxu0
    %v516 = vadd.f32 0.0, %v515
    %v517 = vpop.f32.mrf.mxu0
    %v518 = vadd.f32 0.0, %v517
    %v519 = vpop.f32.mrf.mxu0
    %v520 = vadd.f32 0.0, %v519
    %v521 = vpop.f32.mrf.mxu0
    %v522 = vadd.f32 0.0, %v521
    %523 = vmatprep.mubr.bf16.mxu0 0
    %524 = vmatmul.mubr.bf16.gmra.mxu0 %v267
    %v525 = vpop.f32.mrf.mxu0
    %v526 = vadd.f32 0.0, %v525
    %v527 = vpop.f32.mrf.mxu0
    %v528 = vadd.f32 0.0, %v527
    %v529 = vpop.f32.mrf.mxu0
    %v530 = vadd.f32 0.0, %v529
    %v531 = vpop.f32.mrf.mxu0
    %v532 = vadd.f32 0.0, %v531
    %533 = vdwg.mxu0
    %534 = vmatprep.subr.bf16.mxu0 0
    %535 = vmatpush1.bf16.msra.mxu0 0
    %536 = vmatprep.subr.bf16.mxu0 0
    %537 = vmatpush1.bf16.msra.mxu0 0
    %538 = vmatprep.subr.bf16.mxu0 0
    %539 = vmatpush1.bf16.msra.mxu0 0
    %540 = vmatprep.subr.bf16.mxu0 0
    %541 = vmatpush1.bf16.msra.mxu0 0
    %542 = vmatprep.subr.bf16.mxu0 0
    %543 = vmatpush1.bf16.msra.mxu0 0
    %544 = vmatprep.subr.bf16.mxu0 0
    %545 = vmatpush1.bf16.msra.mxu0 0
    %546 = vmatprep.subr.bf16.mxu0 0
    %547 = vmatpush1.bf16.msra.mxu0 0
    %548 = vmatprep.subr.bf16.mxu0 %v196
    %549 = vmatpush1.bf16.msra.mxu0 %v190
    %550 = vmatprep.subr.bf16.mxu0 0
    %551 = vmatpush2.bf16.msra.mxu0 0
    %552 = vmatprep.subr.bf16.mxu0 0
    %553 = vmatpush2.bf16.msra.mxu0 0
    %554 = vmatprep.subr.bf16.mxu0 0
    %555 = vmatpush2.bf16.msra.mxu0 0
    %556 = vmatprep.subr.bf16.mxu0 0
    %557 = vmatpush2.bf16.msra.mxu0 0
    %558 = vmatprep.subr.bf16.mxu0 0
    %559 = vmatpush2.bf16.msra.mxu0 0
    %560 = vmatprep.subr.bf16.mxu0 0
    %561 = vmatpush2.bf16.msra.mxu0 0
    %562 = vmatprep.subr.bf16.mxu0 0
    %563 = vmatpush2.bf16.msra.mxu0 0
    %564 = vmatprep.subr.bf16.mxu0 0
    %565 = vmatpush2.bf16.msra.mxu0 0
    %566 = vmatprep.mubr.bf16.mxu0 0
    %567 = vmatmul.mubr.bf16.gmra.mxu0 %v264
    %v568 = vpop.f32.mrf.mxu0
    %v569 = vadd.f32 0.0, %v568
    %v570 = vpop.f32.mrf.mxu0
    %v571 = vadd.f32 0.0, %v570
    %v572 = vpop.f32.mrf.mxu0
    %v573 = vadd.f32 0.0, %v572
    %v574 = vpop.f32.mrf.mxu0
    %v575 = vadd.f32 0.0, %v574
    %576 = vmatprep.mubr.bf16.mxu0 0
    %577 = vmatmul.mubr.bf16.gmra.mxu0 %v267
    %v578 = vpop.f32.mrf.mxu0
    %v579 = vadd.f32 0.0, %v578
    %v580 = vpop.f32.mrf.mxu0
    %v581 = vadd.f32 0.0, %v580
    %v582 = vpop.f32.mrf.mxu0
    %v583 = vadd.f32 0.0, %v582
    %v584 = vpop.f32.mrf.mxu0
    %v585 = vadd.f32 0.0, %v584
    %586 = vdwg.mxu0
    %587 = vmatprep.subr.bf16.mxu0 0
    %588 = vmatpush1.bf16.msra.mxu0 0
    %589 = vmatprep.subr.bf16.mxu0 0
    %590 = vmatpush1.bf16.msra.mxu0 0
    %591 = vmatprep.subr.bf16.mxu0 0
    %592 = vmatpush1.bf16.msra.mxu0 0
    %593 = vmatprep.subr.bf16.mxu0 0
    %594 = vmatpush1.bf16.msra.mxu0 0
    %595 = vmatprep.subr.bf16.mxu0 0
    %596 = vmatpush1.bf16.msra.mxu0 0
    %597 = vmatprep.subr.bf16.mxu0 0
    %598 = vmatpush1.bf16.msra.mxu0 0
    %599 = vmatprep.subr.bf16.mxu0 0
    %600 = vmatpush1.bf16.msra.mxu0 0
    %601 = vmatprep.subr.bf16.mxu0 %v208
    %602 = vmatpush1.bf16.msra.mxu0 %v202
    %603 = vmatprep.subr.bf16.mxu0 0
    %604 = vmatpush2.bf16.msra.mxu0 0
    %605 = vmatprep.subr.bf16.mxu0 0
    %606 = vmatpush2.bf16.msra.mxu0 0
    %607 = vmatprep.subr.bf16.mxu0 0
    %608 = vmatpush2.bf16.msra.mxu0 0
    %609 = vmatprep.subr.bf16.mxu0 0
    %610 = vmatpush2.bf16.msra.mxu0 0
    %611 = vmatprep.subr.bf16.mxu0 0
    %612 = vmatpush2.bf16.msra.mxu0 0
    %613 = vmatprep.subr.bf16.mxu0 0
    %614 = vmatpush2.bf16.msra.mxu0 0
    %615 = vmatprep.subr.bf16.mxu0 0
    %616 = vmatpush2.bf16.msra.mxu0 0
    %617 = vmatprep.subr.bf16.mxu0 0
    %618 = vmatpush2.bf16.msra.mxu0 0
    %619 = vmatprep.mubr.bf16.mxu0 0
    %620 = vmatmul.mubr.bf16.gmra.mxu0 %v264
    %v621 = vpop.f32.mrf.mxu0
    %v622 = vadd.f32 0.0, %v621
    %v623 = vpop.f32.mrf.mxu0
    %v624 = vadd.f32 0.0, %v623
    %v625 = vpop.f32.mrf.mxu0
    %v626 = vadd.f32 0.0, %v625
    %v627 = vpop.f32.mrf.mxu0
    %v628 = vadd.f32 0.0, %v627
    %629 = vmatprep.mubr.bf16.mxu0 0
    %630 = vmatmul.mubr.bf16.gmra.mxu0 %v267
    %v631 = vpop.f32.mrf.mxu0
    %v632 = vadd.f32 0.0, %v631
    %v633 = vpop.f32.mrf.mxu0
    %v634 = vadd.f32 0.0, %v633
    %v635 = vpop.f32.mrf.mxu0
    %v636 = vadd.f32 0.0, %v635
    %v637 = vpop.f32.mrf.mxu0
    %v638 = vadd.f32 0.0, %v637
    %639 = vdwg.mxu0
    %640 = vmatprep.subr.bf16.mxu0 0
    %641 = vmatpush1.bf16.msra.mxu0 0
    %642 = vmatprep.subr.bf16.mxu0 0
    %643 = vmatpush1.bf16.msra.mxu0 0
    %644 = vmatprep.subr.bf16.mxu0 0
    %645 = vmatpush1.bf16.msra.mxu0 0
    %646 = vmatprep.subr.bf16.mxu0 0
    %647 = vmatpush1.bf16.msra.mxu0 0
    %648 = vmatprep.subr.bf16.mxu0 0
    %649 = vmatpush1.bf16.msra.mxu0 0
    %650 = vmatprep.subr.bf16.mxu0 0
    %651 = vmatpush1.bf16.msra.mxu0 0
    %652 = vmatprep.subr.bf16.mxu0 0
    %653 = vmatpush1.bf16.msra.mxu0 0
    %654 = vmatprep.subr.bf16.mxu0 %v220
    %655 = vmatpush1.bf16.msra.mxu0 %v214
    %656 = vmatprep.subr.bf16.mxu0 0
    %657 = vmatpush2.bf16.msra.mxu0 0
    %658 = vmatprep.subr.bf16.mxu0 0
    %659 = vmatpush2.bf16.msra.mxu0 0
    %660 = vmatprep.subr.bf16.mxu0 0
    %661 = vmatpush2.bf16.msra.mxu0 0
    %662 = vmatprep.subr.bf16.mxu0 0
    %663 = vmatpush2.bf16.msra.mxu0 0
    %664 = vmatprep.subr.bf16.mxu0 0
    %665 = vmatpush2.bf16.msra.mxu0 0
    %666 = vmatprep.subr.bf16.mxu0 0
    %667 = vmatpush2.bf16.msra.mxu0 0
    %668 = vmatprep.subr.bf16.mxu0 0
    %669 = vmatpush2.bf16.msra.mxu0 0
    %670 = vmatprep.subr.bf16.mxu0 0
    %671 = vmatpush2.bf16.msra.mxu0 0
    %672 = vmatprep.mubr.bf16.mxu0 0
    %673 = vmatmul.mubr.bf16.gmra.mxu0 %v264
    %v674 = vpop.f32.mrf.mxu0
    %v675 = vadd.f32 0.0, %v674
    %v676 = vpop.f32.mrf.mxu0
    %v677 = vadd.f32 0.0, %v676
    %v678 = vpop.f32.mrf.mxu0
    %v679 = vadd.f32 0.0, %v678
    %v680 = vpop.f32.mrf.mxu0
    %v681 = vadd.f32 0.0, %v680
    %682 = vmatprep.mubr.bf16.mxu0 0
    %683 = vmatmul.mubr.bf16.gmra.mxu0 %v267
    %v684 = vpop.f32.mrf.mxu0
    %v685 = vadd.f32 0.0, %v684
    %v686 = vpop.f32.mrf.mxu0
    %v687 = vadd.f32 0.0, %v686
    %v688 = vpop.f32.mrf.mxu0
    %v689 = vadd.f32 0.0, %v688
    %v690 = vpop.f32.mrf.mxu0
    %v691 = vadd.f32 0.0, %v690
    %692 = vdwg.mxu0
    %v693 = vmax.f32 %v304, 0.0
    %v694 = vmax.f32 %v306, 0.0
    %v695 = vmax.f32 %v357, 0.0
    %v696 = vmax.f32 %v359, 0.0
    %v697 = vmax.f32 %v410, 0.0
    %v698 = vmax.f32 %v412, 0.0
    %v699 = vmax.f32 %v463, 0.0
    %v700 = vmax.f32 %v465, 0.0
    %v701 = vmax.f32 %v516, 0.0
    %v702 = vmax.f32 %v518, 0.0
    %v703 = vmax.f32 %v569, 0.0
    %v704 = vmax.f32 %v571, 0.0
    %v705 = vmax.f32 %v622, 0.0
    %v706 = vmax.f32 %v624, 0.0
    %v707 = vmax.f32 %v675, 0.0
    %v708 = vmax.f32 %v677, 0.0
    %v709 = vmax.f32 %v308, 0.0
    %v710 = vmax.f32 %v310, 0.0
    %v711 = vmax.f32 %v361, 0.0
    %v712 = vmax.f32 %v363, 0.0
    %v713 = vmax.f32 %v414, 0.0
    %v714 = vmax.f32 %v416, 0.0
    %v715 = vmax.f32 %v467, 0.0
    %v716 = vmax.f32 %v469, 0.0
    %v717 = vmax.f32 %v520, 0.0
    %v718 = vmax.f32 %v522, 0.0
    %v719 = vmax.f32 %v573, 0.0
    %v720 = vmax.f32 %v575, 0.0
    %v721 = vmax.f32 %v626, 0.0
    %v722 = vmax.f32 %v628, 0.0
    %v723 = vmax.f32 %v679, 0.0
    %v724 = vmax.f32 %v681, 0.0
    %v725 = vmax.f32 %v314, 0.0
    %v726 = vmax.f32 %v316, 0.0
    %v727 = vmax.f32 %v367, 0.0
    %v728 = vmax.f32 %v369, 0.0
    %v729 = vmax.f32 %v420, 0.0
    %v730 = vmax.f32 %v422, 0.0
    %v731 = vmax.f32 %v473, 0.0
    %v732 = vmax.f32 %v475, 0.0
    %v733 = vmax.f32 %v526, 0.0
    %v734 = vmax.f32 %v528, 0.0
    %v735 = vmax.f32 %v579, 0.0
    %v736 = vmax.f32 %v581, 0.0
    %v737 = vmax.f32 %v632, 0.0
    %v738 = vmax.f32 %v634, 0.0
    %v739 = vmax.f32 %v685, 0.0
    %v740 = vmax.f32 %v687, 0.0
    %v741 = vmax.f32 %v318, 0.0
    %v742 = vmax.f32 %v320, 0.0
    %v743 = vmax.f32 %v371, 0.0
    %v744 = vmax.f32 %v373, 0.0
    %v745 = vmax.f32 %v424, 0.0
    %v746 = vmax.f32 %v426, 0.0
    %v747 = vmax.f32 %v477, 0.0
    %v748 = vmax.f32 %v479, 0.0
    %v749 = vmax.f32 %v530, 0.0
    %v750 = vmax.f32 %v532, 0.0
    %v751 = vmax.f32 %v583, 0.0
    %v752 = vmax.f32 %v585, 0.0
    %v753 = vmax.f32 %v636, 0.0
    %v754 = vmax.f32 %v638, 0.0
    %v755 = vmax.f32 %v689, 0.0
    %v756 = vmax.f32 %v691, 0.0
    %v757 = vlaneseq
    %v758 = vshrl.u32 %v757, 7
    %v759 = vsub.s32 0, %v758
    %v760 = vrot.slane %v77, %v759
    %v761 = vlaneseq
    %v762 = vshrl.u32 %v761, 7
    %v763 = vsub.s32 0, %v762
    %v764 = vrot.slane %v223, %v763
    %v765 = vlaneseq
    %v766 = vshrl.u32 %v765, 7
    %v767 = vsub.s32 0, %v766
    %v768 = vrot.slane %v225, %v767
    %v769 = vlaneseq
    %v770 = vshrl.u32 %v769, 7
    %v771 = vsub.s32 0, %v770
    %v772 = vrot.slane %v227, %v771
    %v773 = vlaneseq
    %v774 = vshrl.u32 %v773, 7
    %v775 = vsub.s32 0, %v774
    %v776 = vrot.slane %v229, %v775
    %v777 = vlaneseq
    %v778 = vshrl.u32 %v777, 7
    %v779 = vsub.s32 0, %v778
    %v780 = vrot.slane %v231, %v779
    %v781 = vlaneseq
    %v782 = vshrl.u32 %v781, 7
    %v783 = vsub.s32 0, %v782
    %v784 = vrot.slane %v233, %v783
    %v785 = vlaneseq
    %v786 = vshrl.u32 %v785, 7
    %v787 = vsub.s32 0, %v786
    %v788 = vrot.slane %v235, %v787
    %v789 = vlaneseq
    %v790 = vshrl.u32 %v789, 7
    %v791 = vsub.s32 0, %v790
    %v792 = vrot.slane %v78, %v791
    %v793 = vlaneseq
    %v794 = vshrl.u32 %v793, 7
    %v795 = vsub.s32 0, %v794
    %v796 = vrot.slane %v238, %v795
    %v797 = vlaneseq
    %v798 = vshrl.u32 %v797, 7
    %v799 = vsub.s32 0, %v798
    %v800 = vrot.slane %v240, %v799
    %v801 = vlaneseq
    %v802 = vshrl.u32 %v801, 7
    %v803 = vsub.s32 0, %v802
    %v804 = vrot.slane %v242, %v803
    %v805 = vlaneseq
    %v806 = vshrl.u32 %v805, 7
    %v807 = vsub.s32 0, %v806
    %v808 = vrot.slane %v244, %v807
    %v809 = vlaneseq
    %v810 = vshrl.u32 %v809, 7
    %v811 = vsub.s32 0, %v810
    %v812 = vrot.slane %v246, %v811
    %v813 = vlaneseq
    %v814 = vshrl.u32 %v813, 7
    %v815 = vsub.s32 0, %v814
    %v816 = vrot.slane %v248, %v815
    %v817 = vlaneseq
    %v818 = vshrl.u32 %v817, 7
    %v819 = vsub.s32 0, %v818
    %v820 = vrot.slane %v250, %v819
    %v821 = vmul.f32 %v693, %v760
    %v822 = vmul.f32 %v694, %v764
    %v823 = vmul.f32 %v695, %v768
    %v824 = vmul.f32 %v696, %v772
    %v825 = vmul.f32 %v697, %v776
    %v826 = vmul.f32 %v698, %v780
    %v827 = vmul.f32 %v699, %v784
    %v828 = vmul.f32 %v700, %v788
    %v829 = vmul.f32 %v701, %v792
    %v830 = vmul.f32 %v702, %v796
    %v831 = vmul.f32 %v703, %v800
    %v832 = vmul.f32 %v704, %v804
    %v833 = vmul.f32 %v705, %v808
    %v834 = vmul.f32 %v706, %v812
    %v835 = vmul.f32 %v707, %v816
    %v836 = vmul.f32 %v708, %v820
    %v837 = vmul.f32 %v709, %v760
    %v838 = vmul.f32 %v710, %v764
    %v839 = vmul.f32 %v711, %v768
    %v840 = vmul.f32 %v712, %v772
    %v841 = vmul.f32 %v713, %v776
    %v842 = vmul.f32 %v714, %v780
    %v843 = vmul.f32 %v715, %v784
    %v844 = vmul.f32 %v716, %v788
    %v845 = vmul.f32 %v717, %v792
    %v846 = vmul.f32 %v718, %v796
    %v847 = vmul.f32 %v719, %v800
    %v848 = vmul.f32 %v720, %v804
    %v849 = vmul.f32 %v721, %v808
    %v850 = vmul.f32 %v722, %v812
    %v851 = vmul.f32 %v723, %v816
    %v852 = vmul.f32 %v724, %v820
    %v853 = vmul.f32 %v725, %v760
    %v854 = vmul.f32 %v726, %v764
    %v855 = vmul.f32 %v727, %v768
    %v856 = vmul.f32 %v728, %v772
    %v857 = vmul.f32 %v729, %v776
    %v858 = vmul.f32 %v730, %v780
    %v859 = vmul.f32 %v731, %v784
    %v860 = vmul.f32 %v732, %v788
    %v861 = vmul.f32 %v733, %v792
    %v862 = vmul.f32 %v734, %v796
    %v863 = vmul.f32 %v735, %v800
    %v864 = vmul.f32 %v736, %v804
    %v865 = vmul.f32 %v737, %v808
    %v866 = vmul.f32 %v738, %v812
    %v867 = vmul.f32 %v739, %v816
    %v868 = vmul.f32 %v740, %v820
    %v869 = vmul.f32 %v741, %v760
    %v870 = vmul.f32 %v742, %v764
    %v871 = vmul.f32 %v743, %v768
    %v872 = vmul.f32 %v744, %v772
    %v873 = vmul.f32 %v745, %v776
    %v874 = vmul.f32 %v746, %v780
    %v875 = vmul.f32 %v747, %v784
    %v876 = vmul.f32 %v748, %v788
    %v877 = vmul.f32 %v749, %v792
    %v878 = vmul.f32 %v750, %v796
    %v879 = vmul.f32 %v751, %v800
    %v880 = vmul.f32 %v752, %v804
    %v881 = vmul.f32 %v753, %v808
    %v882 = vmul.f32 %v754, %v812
    %v883 = vmul.f32 %v755, %v816
    %v884 = vmul.f32 %v756, %v820
    %v885 = vmax.f32 %v821, %v822
    %v886 = vmax.f32 %v837, %v838
    %v887 = vmax.f32 %v853, %v854
    %v888 = vmax.f32 %v869, %v870
    %v889 = vmax.f32 %v823, %v824
    %v890 = vmax.f32 %v839, %v840
    %v891 = vmax.f32 %v855, %v856
    %v892 = vmax.f32 %v871, %v872
    %v893 = vmax.f32 %v825, %v826
    %v894 = vmax.f32 %v841, %v842
    %v895 = vmax.f32 %v857, %v858
    %v896 = vmax.f32 %v873, %v874
    %v897 = vmax.f32 %v827, %v828
    %v898 = vmax.f32 %v843, %v844
    %v899 = vmax.f32 %v859, %v860
    %v900 = vmax.f32 %v875, %v876
    %v901 = vmax.f32 %v829, %v830
    %v902 = vmax.f32 %v845, %v846
    %v903 = vmax.f32 %v861, %v862
    %v904 = vmax.f32 %v877, %v878
    %v905 = vmax.f32 %v831, %v832
    %v906 = vmax.f32 %v847, %v848
    %v907 = vmax.f32 %v863, %v864
    %v908 = vmax.f32 %v879, %v880
    %v909 = vmax.f32 %v833, %v834
    %v910 = vmax.f32 %v849, %v850
    %v911 = vmax.f32 %v865, %v866
    %v912 = vmax.f32 %v881, %v882
    %v913 = vmax.f32 %v835, %v836
    %v914 = vmax.f32 %v851, %v852
    %v915 = vmax.f32 %v867, %v868
    %v916 = vmax.f32 %v883, %v884
    %v917 = vmax.f32 %v885, %v889
    %v918 = vmax.f32 %v886, %v890
    %v919 = vmax.f32 %v887, %v891
    %v920 = vmax.f32 %v888, %v892
    %v921 = vmax.f32 %v893, %v897
    %v922 = vmax.f32 %v894, %v898
    %v923 = vmax.f32 %v895, %v899
    %v924 = vmax.f32 %v896, %v900
    %v925 = vmax.f32 %v901, %v905
    %v926 = vmax.f32 %v902, %v906
    %v927 = vmax.f32 %v903, %v907
    %v928 = vmax.f32 %v904, %v908
    %v929 = vmax.f32 %v909, %v913
    %v930 = vmax.f32 %v910, %v914
    %v931 = vmax.f32 %v911, %v915
    %v932 = vmax.f32 %v912, %v916
    %v933 = vmax.f32 %v917, %v921
    %v934 = vmax.f32 %v918, %v922
    %v935 = vmax.f32 %v919, %v923
    %v936 = vmax.f32 %v920, %v924
    %v937 = vmax.f32 %v925, %v929
    %v938 = vmax.f32 %v926, %v930
    %v939 = vmax.f32 %v927, %v931
    %v940 = vmax.f32 %v928, %v932
    %v941 = vmax.f32 %v933, %v937
    %v942 = vmax.f32 %v934, %v938
    %v943 = vmax.f32 %v935, %v939
    %v944 = vmax.f32 %v936, %v940
    %v945 = vpack.c.bf16 %v942, %v941
    %v946 = vpack.c.bf16 %v944, %v943
    %v951 = vunpack.c.l.b16 %v59
    %v952 = vunpack.c.l.b16 %v60
    %v953 = vunpack.c.l.b16 %v61
    %v954 = vunpack.c.l.b16 %v62
    %v955 = vpack.c.b16 %v952, %v951
    %v956 = vpack.c.b16 %v954, %v953
    %vm957 = vcmask 261120
    %v959 = vsel %vm957, %v955, 0
    %v962 = vsel %vm957, %v956, 0
    %964 = vmatprep.subr.bf16.mxu0 0
    %965 = vmatpush1.bf16.msra.mxu0 0
    %966 = vmatprep.subr.bf16.mxu0 0
    %967 = vmatpush1.bf16.msra.mxu0 0
    %968 = vmatprep.subr.bf16.mxu0 0
    %969 = vmatpush1.bf16.msra.mxu0 0
    %970 = vmatprep.subr.bf16.mxu0 0
    %971 = vmatpush1.bf16.msra.mxu0 0
    %972 = vmatprep.subr.bf16.mxu0 0
    %973 = vmatpush1.bf16.msra.mxu0 0
    %974 = vmatprep.subr.bf16.mxu0 0
    %975 = vmatpush1.bf16.msra.mxu0 0
    %976 = vmatprep.subr.bf16.mxu0 0
    %977 = vmatpush1.bf16.msra.mxu0 %v946
    %978 = vmatprep.subr.bf16.mxu0 0
    %979 = vmatpush1.bf16.msra.mxu0 %v945
    %980 = vmatprep.subr.bf16.mxu0 0
    %981 = vmatpush2.bf16.msra.mxu0 0
    %982 = vmatprep.subr.bf16.mxu0 0
    %983 = vmatpush2.bf16.msra.mxu0 0
    %984 = vmatprep.subr.bf16.mxu0 0
    %985 = vmatpush2.bf16.msra.mxu0 0
    %986 = vmatprep.subr.bf16.mxu0 0
    %987 = vmatpush2.bf16.msra.mxu0 0
    %988 = vmatprep.subr.bf16.mxu0 0
    %989 = vmatpush2.bf16.msra.mxu0 0
    %990 = vmatprep.subr.bf16.mxu0 0
    %991 = vmatpush2.bf16.msra.mxu0 0
    %992 = vmatprep.subr.bf16.mxu0 0
    %993 = vmatpush2.bf16.msra.mxu0 0
    %994 = vmatprep.subr.bf16.mxu0 0
    %995 = vmatpush2.bf16.msra.mxu0 0
    %996 = vmatprep.mubr.bf16.mxu0 0
    %997 = vmatmul.mubr.bf16.gmra.mxu0 %v959
    %v998 = vpop.f32.mrf.mxu0
    %v999 = vadd.f32 0.0, %v998
    %v1000 = vpop.f32.mrf.mxu0
    %v1001 = vpop.f32.mrf.mxu0
    %v1002 = vadd.f32 0.0, %v1001
    %v1003 = vpop.f32.mrf.mxu0
    %1004 = vmatprep.mubr.bf16.mxu0 0
    %1005 = vmatmul.mubr.bf16.gmra.mxu0 %v962
    %v1006 = vpop.f32.mrf.mxu0
    %v1007 = vadd.f32 0.0, %v1006
    %v1008 = vpop.f32.mrf.mxu0
    %v1009 = vpop.f32.mrf.mxu0
    %v1010 = vadd.f32 0.0, %v1009
    %v1011 = vpop.f32.mrf.mxu0
    %1012 = vdwg.mxu0
    %v1013 = vpack.c.bf16 %v837, %v821
    %v1014 = vpack.c.bf16 %v838, %v822
    %v1015 = vpack.c.bf16 %v839, %v823
    %v1016 = vpack.c.bf16 %v840, %v824
    %v1017 = vpack.c.bf16 %v841, %v825
    %v1018 = vpack.c.bf16 %v842, %v826
    %v1019 = vpack.c.bf16 %v843, %v827
    %v1020 = vpack.c.bf16 %v844, %v828
    %v1021 = vpack.c.bf16 %v845, %v829
    %v1022 = vpack.c.bf16 %v846, %v830
    %v1023 = vpack.c.bf16 %v847, %v831
    %v1024 = vpack.c.bf16 %v848, %v832
    %v1025 = vpack.c.bf16 %v849, %v833
    %v1026 = vpack.c.bf16 %v850, %v834
    %v1027 = vpack.c.bf16 %v851, %v835
    %v1028 = vpack.c.bf16 %v852, %v836
    %v1029 = vpack.c.bf16 %v869, %v853
    %v1030 = vpack.c.bf16 %v870, %v854
    %v1031 = vpack.c.bf16 %v871, %v855
    %v1032 = vpack.c.bf16 %v872, %v856
    %v1033 = vpack.c.bf16 %v873, %v857
    %v1034 = vpack.c.bf16 %v874, %v858
    %v1035 = vpack.c.bf16 %v875, %v859
    %v1036 = vpack.c.bf16 %v876, %v860
    %v1037 = vpack.c.bf16 %v877, %v861
    %v1038 = vpack.c.bf16 %v878, %v862
    %v1039 = vpack.c.bf16 %v879, %v863
    %v1040 = vpack.c.bf16 %v880, %v864
    %v1041 = vpack.c.bf16 %v881, %v865
    %v1042 = vpack.c.bf16 %v882, %v866
    %v1043 = vpack.c.bf16 %v883, %v867
    %v1044 = vpack.c.bf16 %v884, %v868
    %v1049 = vunpack.c.l.b16 %v55
    %v1050 = vunpack.c.l.b16 %v56
    %v1051 = vunpack.c.l.b16 %v57
    %v1052 = vunpack.c.l.b16 %v58
    %v1053 = vpack.c.b16 %v1050, %v1049
    %v1054 = vpack.c.b16 %v1052, %v1051
    %v1056 = vsel %vm957, %v1053, 0
    %v1059 = vsel %vm957, %v1054, 0
    %1061 = vmatprep.subr.bf16.mxu0 0
    %1062 = vmatpush1.bf16.msra.mxu0 0
    %1063 = vmatprep.subr.bf16.mxu0 0
    %1064 = vmatpush1.bf16.msra.mxu0 0
    %1065 = vmatprep.subr.bf16.mxu0 0
    %1066 = vmatpush1.bf16.msra.mxu0 0
    %1067 = vmatprep.subr.bf16.mxu0 0
    %1068 = vmatpush1.bf16.msra.mxu0 0
    %1069 = vmatprep.subr.bf16.mxu0 0
    %1070 = vmatpush1.bf16.msra.mxu0 0
    %1071 = vmatprep.subr.bf16.mxu0 0
    %1072 = vmatpush1.bf16.msra.mxu0 0
    %1073 = vmatprep.subr.bf16.mxu0 %v1030
    %1074 = vmatpush1.bf16.msra.mxu0 %v1029
    %1075 = vmatprep.subr.bf16.mxu0 %v1014
    %1076 = vmatpush1.bf16.msra.mxu0 %v1013
    %1077 = vmatprep.subr.bf16.mxu0 0
    %1078 = vmatpush2.bf16.msra.mxu0 0
    %1079 = vmatprep.subr.bf16.mxu0 0
    %1080 = vmatpush2.bf16.msra.mxu0 0
    %1081 = vmatprep.subr.bf16.mxu0 0
    %1082 = vmatpush2.bf16.msra.mxu0 0
    %1083 = vmatprep.subr.bf16.mxu0 0
    %1084 = vmatpush2.bf16.msra.mxu0 0
    %1085 = vmatprep.subr.bf16.mxu0 0
    %1086 = vmatpush2.bf16.msra.mxu0 0
    %1087 = vmatprep.subr.bf16.mxu0 0
    %1088 = vmatpush2.bf16.msra.mxu0 0
    %1089 = vmatprep.subr.bf16.mxu0 0
    %1090 = vmatpush2.bf16.msra.mxu0 0
    %1091 = vmatprep.subr.bf16.mxu0 0
    %1092 = vmatpush2.bf16.msra.mxu0 0
    %1093 = vmatprep.mubr.bf16.mxu0 0
    %1094 = vmatmul.mubr.bf16.gmra.mxu0 %v1056
    %v1095 = vpop.f32.mrf.mxu0
    %v1096 = vadd.f32 0.0, %v1095
    %v1097 = vpop.f32.mrf.mxu0
    %v1098 = vadd.f32 0.0, %v1097
    %v1099 = vpop.f32.mrf.mxu0
    %v1100 = vadd.f32 0.0, %v1099
    %v1101 = vpop.f32.mrf.mxu0
    %v1102 = vadd.f32 0.0, %v1101
    %1103 = vmatprep.mubr.bf16.mxu0 0
    %1104 = vmatmul.mubr.bf16.gmra.mxu0 %v1059
    %v1105 = vpop.f32.mrf.mxu0
    %v1106 = vadd.f32 0.0, %v1105
    %v1107 = vpop.f32.mrf.mxu0
    %v1108 = vadd.f32 0.0, %v1107
    %v1109 = vpop.f32.mrf.mxu0
    %v1110 = vadd.f32 0.0, %v1109
    %v1111 = vpop.f32.mrf.mxu0
    %v1112 = vadd.f32 0.0, %v1111
    %1113 = vdwg.mxu0
    %1114 = vmatprep.subr.bf16.mxu0 0
    %1115 = vmatpush1.bf16.msra.mxu0 0
    %1116 = vmatprep.subr.bf16.mxu0 0
    %1117 = vmatpush1.bf16.msra.mxu0 0
    %1118 = vmatprep.subr.bf16.mxu0 0
    %1119 = vmatpush1.bf16.msra.mxu0 0
    %1120 = vmatprep.subr.bf16.mxu0 0
    %1121 = vmatpush1.bf16.msra.mxu0 0
    %1122 = vmatprep.subr.bf16.mxu0 0
    %1123 = vmatpush1.bf16.msra.mxu0 0
    %1124 = vmatprep.subr.bf16.mxu0 0
    %1125 = vmatpush1.bf16.msra.mxu0 0
    %1126 = vmatprep.subr.bf16.mxu0 %v1032
    %1127 = vmatpush1.bf16.msra.mxu0 %v1031
    %1128 = vmatprep.subr.bf16.mxu0 %v1016
    %1129 = vmatpush1.bf16.msra.mxu0 %v1015
    %1130 = vmatprep.subr.bf16.mxu0 0
    %1131 = vmatpush2.bf16.msra.mxu0 0
    %1132 = vmatprep.subr.bf16.mxu0 0
    %1133 = vmatpush2.bf16.msra.mxu0 0
    %1134 = vmatprep.subr.bf16.mxu0 0
    %1135 = vmatpush2.bf16.msra.mxu0 0
    %1136 = vmatprep.subr.bf16.mxu0 0
    %1137 = vmatpush2.bf16.msra.mxu0 0
    %1138 = vmatprep.subr.bf16.mxu0 0
    %1139 = vmatpush2.bf16.msra.mxu0 0
    %1140 = vmatprep.subr.bf16.mxu0 0
    %1141 = vmatpush2.bf16.msra.mxu0 0
    %1142 = vmatprep.subr.bf16.mxu0 0
    %1143 = vmatpush2.bf16.msra.mxu0 0
    %1144 = vmatprep.subr.bf16.mxu0 0
    %1145 = vmatpush2.bf16.msra.mxu0 0
    %1146 = vmatprep.mubr.bf16.mxu0 0
    %1147 = vmatmul.mubr.bf16.gmra.mxu0 %v1056
    %v1148 = vpop.f32.mrf.mxu0
    %v1149 = vadd.f32 0.0, %v1148
    %v1150 = vpop.f32.mrf.mxu0
    %v1151 = vadd.f32 0.0, %v1150
    %v1152 = vpop.f32.mrf.mxu0
    %v1153 = vadd.f32 0.0, %v1152
    %v1154 = vpop.f32.mrf.mxu0
    %v1155 = vadd.f32 0.0, %v1154
    %1156 = vmatprep.mubr.bf16.mxu0 0
    %1157 = vmatmul.mubr.bf16.gmra.mxu0 %v1059
    %v1158 = vpop.f32.mrf.mxu0
    %v1159 = vadd.f32 0.0, %v1158
    %v1160 = vpop.f32.mrf.mxu0
    %v1161 = vadd.f32 0.0, %v1160
    %v1162 = vpop.f32.mrf.mxu0
    %v1163 = vadd.f32 0.0, %v1162
    %v1164 = vpop.f32.mrf.mxu0
    %v1165 = vadd.f32 0.0, %v1164
    %1166 = vdwg.mxu0
    %1167 = vmatprep.subr.bf16.mxu0 0
    %1168 = vmatpush1.bf16.msra.mxu0 0
    %1169 = vmatprep.subr.bf16.mxu0 0
    %1170 = vmatpush1.bf16.msra.mxu0 0
    %1171 = vmatprep.subr.bf16.mxu0 0
    %1172 = vmatpush1.bf16.msra.mxu0 0
    %1173 = vmatprep.subr.bf16.mxu0 0
    %1174 = vmatpush1.bf16.msra.mxu0 0
    %1175 = vmatprep.subr.bf16.mxu0 0
    %1176 = vmatpush1.bf16.msra.mxu0 0
    %1177 = vmatprep.subr.bf16.mxu0 0
    %1178 = vmatpush1.bf16.msra.mxu0 0
    %1179 = vmatprep.subr.bf16.mxu0 %v1034
    %1180 = vmatpush1.bf16.msra.mxu0 %v1033
    %1181 = vmatprep.subr.bf16.mxu0 %v1018
    %1182 = vmatpush1.bf16.msra.mxu0 %v1017
    %1183 = vmatprep.subr.bf16.mxu0 0
    %1184 = vmatpush2.bf16.msra.mxu0 0
    %1185 = vmatprep.subr.bf16.mxu0 0
    %1186 = vmatpush2.bf16.msra.mxu0 0
    %1187 = vmatprep.subr.bf16.mxu0 0
    %1188 = vmatpush2.bf16.msra.mxu0 0
    %1189 = vmatprep.subr.bf16.mxu0 0
    %1190 = vmatpush2.bf16.msra.mxu0 0
    %1191 = vmatprep.subr.bf16.mxu0 0
    %1192 = vmatpush2.bf16.msra.mxu0 0
    %1193 = vmatprep.subr.bf16.mxu0 0
    %1194 = vmatpush2.bf16.msra.mxu0 0
    %1195 = vmatprep.subr.bf16.mxu0 0
    %1196 = vmatpush2.bf16.msra.mxu0 0
    %1197 = vmatprep.subr.bf16.mxu0 0
    %1198 = vmatpush2.bf16.msra.mxu0 0
    %1199 = vmatprep.mubr.bf16.mxu0 0
    %1200 = vmatmul.mubr.bf16.gmra.mxu0 %v1056
    %v1201 = vpop.f32.mrf.mxu0
    %v1202 = vadd.f32 0.0, %v1201
    %v1203 = vpop.f32.mrf.mxu0
    %v1204 = vadd.f32 0.0, %v1203
    %v1205 = vpop.f32.mrf.mxu0
    %v1206 = vadd.f32 0.0, %v1205
    %v1207 = vpop.f32.mrf.mxu0
    %v1208 = vadd.f32 0.0, %v1207
    %1209 = vmatprep.mubr.bf16.mxu0 0
    %1210 = vmatmul.mubr.bf16.gmra.mxu0 %v1059
    %v1211 = vpop.f32.mrf.mxu0
    %v1212 = vadd.f32 0.0, %v1211
    %v1213 = vpop.f32.mrf.mxu0
    %v1214 = vadd.f32 0.0, %v1213
    %v1215 = vpop.f32.mrf.mxu0
    %v1216 = vadd.f32 0.0, %v1215
    %v1217 = vpop.f32.mrf.mxu0
    %v1218 = vadd.f32 0.0, %v1217
    %1219 = vdwg.mxu0
    %1220 = vmatprep.subr.bf16.mxu0 0
    %1221 = vmatpush1.bf16.msra.mxu0 0
    %1222 = vmatprep.subr.bf16.mxu0 0
    %1223 = vmatpush1.bf16.msra.mxu0 0
    %1224 = vmatprep.subr.bf16.mxu0 0
    %1225 = vmatpush1.bf16.msra.mxu0 0
    %1226 = vmatprep.subr.bf16.mxu0 0
    %1227 = vmatpush1.bf16.msra.mxu0 0
    %1228 = vmatprep.subr.bf16.mxu0 0
    %1229 = vmatpush1.bf16.msra.mxu0 0
    %1230 = vmatprep.subr.bf16.mxu0 0
    %1231 = vmatpush1.bf16.msra.mxu0 0
    %1232 = vmatprep.subr.bf16.mxu0 %v1036
    %1233 = vmatpush1.bf16.msra.mxu0 %v1035
    %1234 = vmatprep.subr.bf16.mxu0 %v1020
    %1235 = vmatpush1.bf16.msra.mxu0 %v1019
    %1236 = vmatprep.subr.bf16.mxu0 0
    %1237 = vmatpush2.bf16.msra.mxu0 0
    %1238 = vmatprep.subr.bf16.mxu0 0
    %1239 = vmatpush2.bf16.msra.mxu0 0
    %1240 = vmatprep.subr.bf16.mxu0 0
    %1241 = vmatpush2.bf16.msra.mxu0 0
    %1242 = vmatprep.subr.bf16.mxu0 0
    %1243 = vmatpush2.bf16.msra.mxu0 0
    %1244 = vmatprep.subr.bf16.mxu0 0
    %1245 = vmatpush2.bf16.msra.mxu0 0
    %1246 = vmatprep.subr.bf16.mxu0 0
    %1247 = vmatpush2.bf16.msra.mxu0 0
    %1248 = vmatprep.subr.bf16.mxu0 0
    %1249 = vmatpush2.bf16.msra.mxu0 0
    %1250 = vmatprep.subr.bf16.mxu0 0
    %1251 = vmatpush2.bf16.msra.mxu0 0
    %1252 = vmatprep.mubr.bf16.mxu0 0
    %1253 = vmatmul.mubr.bf16.gmra.mxu0 %v1056
    %v1254 = vpop.f32.mrf.mxu0
    %v1255 = vadd.f32 0.0, %v1254
    %v1256 = vpop.f32.mrf.mxu0
    %v1257 = vadd.f32 0.0, %v1256
    %v1258 = vpop.f32.mrf.mxu0
    %v1259 = vadd.f32 0.0, %v1258
    %v1260 = vpop.f32.mrf.mxu0
    %v1261 = vadd.f32 0.0, %v1260
    %1262 = vmatprep.mubr.bf16.mxu0 0
    %1263 = vmatmul.mubr.bf16.gmra.mxu0 %v1059
    %v1264 = vpop.f32.mrf.mxu0
    %v1265 = vadd.f32 0.0, %v1264
    %v1266 = vpop.f32.mrf.mxu0
    %v1267 = vadd.f32 0.0, %v1266
    %v1268 = vpop.f32.mrf.mxu0
    %v1269 = vadd.f32 0.0, %v1268
    %v1270 = vpop.f32.mrf.mxu0
    %v1271 = vadd.f32 0.0, %v1270
    %1272 = vdwg.mxu0
    %1273 = vmatprep.subr.bf16.mxu0 0
    %1274 = vmatpush1.bf16.msra.mxu0 0
    %1275 = vmatprep.subr.bf16.mxu0 0
    %1276 = vmatpush1.bf16.msra.mxu0 0
    %1277 = vmatprep.subr.bf16.mxu0 0
    %1278 = vmatpush1.bf16.msra.mxu0 0
    %1279 = vmatprep.subr.bf16.mxu0 0
    %1280 = vmatpush1.bf16.msra.mxu0 0
    %1281 = vmatprep.subr.bf16.mxu0 0
    %1282 = vmatpush1.bf16.msra.mxu0 0
    %1283 = vmatprep.subr.bf16.mxu0 0
    %1284 = vmatpush1.bf16.msra.mxu0 0
    %1285 = vmatprep.subr.bf16.mxu0 %v1038
    %1286 = vmatpush1.bf16.msra.mxu0 %v1037
    %1287 = vmatprep.subr.bf16.mxu0 %v1022
    %1288 = vmatpush1.bf16.msra.mxu0 %v1021
    %1289 = vmatprep.subr.bf16.mxu0 0
    %1290 = vmatpush2.bf16.msra.mxu0 0
    %1291 = vmatprep.subr.bf16.mxu0 0
    %1292 = vmatpush2.bf16.msra.mxu0 0
    %1293 = vmatprep.subr.bf16.mxu0 0
    %1294 = vmatpush2.bf16.msra.mxu0 0
    %1295 = vmatprep.subr.bf16.mxu0 0
    %1296 = vmatpush2.bf16.msra.mxu0 0
    %1297 = vmatprep.subr.bf16.mxu0 0
    %1298 = vmatpush2.bf16.msra.mxu0 0
    %1299 = vmatprep.subr.bf16.mxu0 0
    %1300 = vmatpush2.bf16.msra.mxu0 0
    %1301 = vmatprep.subr.bf16.mxu0 0
    %1302 = vmatpush2.bf16.msra.mxu0 0
    %1303 = vmatprep.subr.bf16.mxu0 0
    %1304 = vmatpush2.bf16.msra.mxu0 0
    %1305 = vmatprep.mubr.bf16.mxu0 0
    %1306 = vmatmul.mubr.bf16.gmra.mxu0 %v1056
    %v1307 = vpop.f32.mrf.mxu0
    %v1308 = vadd.f32 0.0, %v1307
    %v1309 = vpop.f32.mrf.mxu0
    %v1310 = vadd.f32 0.0, %v1309
    %v1311 = vpop.f32.mrf.mxu0
    %v1312 = vadd.f32 0.0, %v1311
    %v1313 = vpop.f32.mrf.mxu0
    %v1314 = vadd.f32 0.0, %v1313
    %1315 = vmatprep.mubr.bf16.mxu0 0
    %1316 = vmatmul.mubr.bf16.gmra.mxu0 %v1059
    %v1317 = vpop.f32.mrf.mxu0
    %v1318 = vadd.f32 0.0, %v1317
    %v1319 = vpop.f32.mrf.mxu0
    %v1320 = vadd.f32 0.0, %v1319
    %v1321 = vpop.f32.mrf.mxu0
    %v1322 = vadd.f32 0.0, %v1321
    %v1323 = vpop.f32.mrf.mxu0
    %v1324 = vadd.f32 0.0, %v1323
    %1325 = vdwg.mxu0
    %1326 = vmatprep.subr.bf16.mxu0 0
    %1327 = vmatpush1.bf16.msra.mxu0 0
    %1328 = vmatprep.subr.bf16.mxu0 0
    %1329 = vmatpush1.bf16.msra.mxu0 0
    %1330 = vmatprep.subr.bf16.mxu0 0
    %1331 = vmatpush1.bf16.msra.mxu0 0
    %1332 = vmatprep.subr.bf16.mxu0 0
    %1333 = vmatpush1.bf16.msra.mxu0 0
    %1334 = vmatprep.subr.bf16.mxu0 0
    %1335 = vmatpush1.bf16.msra.mxu0 0
    %1336 = vmatprep.subr.bf16.mxu0 0
    %1337 = vmatpush1.bf16.msra.mxu0 0
    %1338 = vmatprep.subr.bf16.mxu0 %v1040
    %1339 = vmatpush1.bf16.msra.mxu0 %v1039
    %1340 = vmatprep.subr.bf16.mxu0 %v1024
    %1341 = vmatpush1.bf16.msra.mxu0 %v1023
    %1342 = vmatprep.subr.bf16.mxu0 0
    %1343 = vmatpush2.bf16.msra.mxu0 0
    %1344 = vmatprep.subr.bf16.mxu0 0
    %1345 = vmatpush2.bf16.msra.mxu0 0
    %1346 = vmatprep.subr.bf16.mxu0 0
    %1347 = vmatpush2.bf16.msra.mxu0 0
    %1348 = vmatprep.subr.bf16.mxu0 0
    %1349 = vmatpush2.bf16.msra.mxu0 0
    %1350 = vmatprep.subr.bf16.mxu0 0
    %1351 = vmatpush2.bf16.msra.mxu0 0
    %1352 = vmatprep.subr.bf16.mxu0 0
    %1353 = vmatpush2.bf16.msra.mxu0 0
    %1354 = vmatprep.subr.bf16.mxu0 0
    %1355 = vmatpush2.bf16.msra.mxu0 0
    %1356 = vmatprep.subr.bf16.mxu0 0
    %1357 = vmatpush2.bf16.msra.mxu0 0
    %1358 = vmatprep.mubr.bf16.mxu0 0
    %1359 = vmatmul.mubr.bf16.gmra.mxu0 %v1056
    %v1360 = vpop.f32.mrf.mxu0
    %v1361 = vadd.f32 0.0, %v1360
    %v1362 = vpop.f32.mrf.mxu0
    %v1363 = vadd.f32 0.0, %v1362
    %v1364 = vpop.f32.mrf.mxu0
    %v1365 = vadd.f32 0.0, %v1364
    %v1366 = vpop.f32.mrf.mxu0
    %v1367 = vadd.f32 0.0, %v1366
    %1368 = vmatprep.mubr.bf16.mxu0 0
    %1369 = vmatmul.mubr.bf16.gmra.mxu0 %v1059
    %v1370 = vpop.f32.mrf.mxu0
    %v1371 = vadd.f32 0.0, %v1370
    %v1372 = vpop.f32.mrf.mxu0
    %v1373 = vadd.f32 0.0, %v1372
    %v1374 = vpop.f32.mrf.mxu0
    %v1375 = vadd.f32 0.0, %v1374
    %v1376 = vpop.f32.mrf.mxu0
    %v1377 = vadd.f32 0.0, %v1376
    %1378 = vdwg.mxu0
    %1379 = vmatprep.subr.bf16.mxu0 0
    %1380 = vmatpush1.bf16.msra.mxu0 0
    %1381 = vmatprep.subr.bf16.mxu0 0
    %1382 = vmatpush1.bf16.msra.mxu0 0
    %1383 = vmatprep.subr.bf16.mxu0 0
    %1384 = vmatpush1.bf16.msra.mxu0 0
    %1385 = vmatprep.subr.bf16.mxu0 0
    %1386 = vmatpush1.bf16.msra.mxu0 0
    %1387 = vmatprep.subr.bf16.mxu0 0
    %1388 = vmatpush1.bf16.msra.mxu0 0
    %1389 = vmatprep.subr.bf16.mxu0 0
    %1390 = vmatpush1.bf16.msra.mxu0 0
    %1391 = vmatprep.subr.bf16.mxu0 %v1042
    %1392 = vmatpush1.bf16.msra.mxu0 %v1041
    %1393 = vmatprep.subr.bf16.mxu0 %v1026
    %1394 = vmatpush1.bf16.msra.mxu0 %v1025
    %1395 = vmatprep.subr.bf16.mxu0 0
    %1396 = vmatpush2.bf16.msra.mxu0 0
    %1397 = vmatprep.subr.bf16.mxu0 0
    %1398 = vmatpush2.bf16.msra.mxu0 0
    %1399 = vmatprep.subr.bf16.mxu0 0
    %1400 = vmatpush2.bf16.msra.mxu0 0
    %1401 = vmatprep.subr.bf16.mxu0 0
    %1402 = vmatpush2.bf16.msra.mxu0 0
    %1403 = vmatprep.subr.bf16.mxu0 0
    %1404 = vmatpush2.bf16.msra.mxu0 0
    %1405 = vmatprep.subr.bf16.mxu0 0
    %1406 = vmatpush2.bf16.msra.mxu0 0
    %1407 = vmatprep.subr.bf16.mxu0 0
    %1408 = vmatpush2.bf16.msra.mxu0 0
    %1409 = vmatprep.subr.bf16.mxu0 0
    %1410 = vmatpush2.bf16.msra.mxu0 0
    %1411 = vmatprep.mubr.bf16.mxu0 0
    %1412 = vmatmul.mubr.bf16.gmra.mxu0 %v1056
    %v1413 = vpop.f32.mrf.mxu0
    %v1414 = vadd.f32 0.0, %v1413
    %v1415 = vpop.f32.mrf.mxu0
    %v1416 = vadd.f32 0.0, %v1415
    %v1417 = vpop.f32.mrf.mxu0
    %v1418 = vadd.f32 0.0, %v1417
    %v1419 = vpop.f32.mrf.mxu0
    %v1420 = vadd.f32 0.0, %v1419
    %1421 = vmatprep.mubr.bf16.mxu0 0
    %1422 = vmatmul.mubr.bf16.gmra.mxu0 %v1059
    %v1423 = vpop.f32.mrf.mxu0
    %v1424 = vadd.f32 0.0, %v1423
    %v1425 = vpop.f32.mrf.mxu0
    %v1426 = vadd.f32 0.0, %v1425
    %v1427 = vpop.f32.mrf.mxu0
    %v1428 = vadd.f32 0.0, %v1427
    %v1429 = vpop.f32.mrf.mxu0
    %v1430 = vadd.f32 0.0, %v1429
    %1431 = vdwg.mxu0
    %1432 = vmatprep.subr.bf16.mxu0 0
    %1433 = vmatpush1.bf16.msra.mxu0 0
    %1434 = vmatprep.subr.bf16.mxu0 0
    %1435 = vmatpush1.bf16.msra.mxu0 0
    %1436 = vmatprep.subr.bf16.mxu0 0
    %1437 = vmatpush1.bf16.msra.mxu0 0
    %1438 = vmatprep.subr.bf16.mxu0 0
    %1439 = vmatpush1.bf16.msra.mxu0 0
    %1440 = vmatprep.subr.bf16.mxu0 0
    %1441 = vmatpush1.bf16.msra.mxu0 0
    %1442 = vmatprep.subr.bf16.mxu0 0
    %1443 = vmatpush1.bf16.msra.mxu0 0
    %1444 = vmatprep.subr.bf16.mxu0 %v1044
    %1445 = vmatpush1.bf16.msra.mxu0 %v1043
    %1446 = vmatprep.subr.bf16.mxu0 %v1028
    %1447 = vmatpush1.bf16.msra.mxu0 %v1027
    %1448 = vmatprep.subr.bf16.mxu0 0
    %1449 = vmatpush2.bf16.msra.mxu0 0
    %1450 = vmatprep.subr.bf16.mxu0 0
    %1451 = vmatpush2.bf16.msra.mxu0 0
    %1452 = vmatprep.subr.bf16.mxu0 0
    %1453 = vmatpush2.bf16.msra.mxu0 0
    %1454 = vmatprep.subr.bf16.mxu0 0
    %1455 = vmatpush2.bf16.msra.mxu0 0
    %1456 = vmatprep.subr.bf16.mxu0 0
    %1457 = vmatpush2.bf16.msra.mxu0 0
    %1458 = vmatprep.subr.bf16.mxu0 0
    %1459 = vmatpush2.bf16.msra.mxu0 0
    %1460 = vmatprep.subr.bf16.mxu0 0
    %1461 = vmatpush2.bf16.msra.mxu0 0
    %1462 = vmatprep.subr.bf16.mxu0 0
    %1463 = vmatpush2.bf16.msra.mxu0 0
    %1464 = vmatprep.mubr.bf16.mxu0 0
    %1465 = vmatmul.mubr.bf16.gmra.mxu0 %v1056
    %v1466 = vpop.f32.mrf.mxu0
    %v1467 = vadd.f32 0.0, %v1466
    %v1468 = vpop.f32.mrf.mxu0
    %v1469 = vadd.f32 0.0, %v1468
    %v1470 = vpop.f32.mrf.mxu0
    %v1471 = vadd.f32 0.0, %v1470
    %v1472 = vpop.f32.mrf.mxu0
    %v1473 = vadd.f32 0.0, %v1472
    %1474 = vmatprep.mubr.bf16.mxu0 0
    %1475 = vmatmul.mubr.bf16.gmra.mxu0 %v1059
    %v1476 = vpop.f32.mrf.mxu0
    %v1477 = vadd.f32 0.0, %v1476
    %v1478 = vpop.f32.mrf.mxu0
    %v1479 = vadd.f32 0.0, %v1478
    %v1480 = vpop.f32.mrf.mxu0
    %v1481 = vadd.f32 0.0, %v1480
    %v1482 = vpop.f32.mrf.mxu0
    %v1483 = vadd.f32 0.0, %v1482
    %1484 = vdwg.mxu0
    %v1485 = vadd.f32 %v1096, %v999
    %v1486 = vadd.f32 %v1100, %v1002
    %v1487 = vadd.f32 %v1106, %v1007
    %v1488 = vadd.f32 %v1110, %v1010
    %v1489 = vmax.f32 %v1485, 0.0
    %v1490 = vmax.f32 %v1486, 0.0
    %v1491 = vmax.f32 %v1487, 0.0
    %v1492 = vmax.f32 %v1488, 0.0
    %v1493 = vpack.c.bf16 %v1490, %v1489
    %v1494 = vpack.c.bf16 %v1492, %v1491
    %v1495 = vadd.f32 %v1098, %v999
    %v1496 = vadd.f32 %v1102, %v1002
    %v1497 = vadd.f32 %v1108, %v1007
    %v1498 = vadd.f32 %v1112, %v1010
    %v1499 = vmax.f32 %v1495, 0.0
    %v1500 = vmax.f32 %v1496, 0.0
    %v1501 = vmax.f32 %v1497, 0.0
    %v1502 = vmax.f32 %v1498, 0.0
    %v1503 = vpack.c.bf16 %v1500, %v1499
    %v1504 = vpack.c.bf16 %v1502, %v1501
    %v1505 = vadd.f32 %v1149, %v999
    %v1506 = vadd.f32 %v1153, %v1002
    %v1507 = vadd.f32 %v1159, %v1007
    %v1508 = vadd.f32 %v1163, %v1010
    %v1509 = vmax.f32 %v1505, 0.0
    %v1510 = vmax.f32 %v1506, 0.0
    %v1511 = vmax.f32 %v1507, 0.0
    %v1512 = vmax.f32 %v1508, 0.0
    %v1513 = vpack.c.bf16 %v1510, %v1509
    %v1514 = vpack.c.bf16 %v1512, %v1511
    %v1515 = vadd.f32 %v1151, %v999
    %v1516 = vadd.f32 %v1155, %v1002
    %v1517 = vadd.f32 %v1161, %v1007
    %v1518 = vadd.f32 %v1165, %v1010
    %v1519 = vmax.f32 %v1515, 0.0
    %v1520 = vmax.f32 %v1516, 0.0
    %v1521 = vmax.f32 %v1517, 0.0
    %v1522 = vmax.f32 %v1518, 0.0
    %v1523 = vpack.c.bf16 %v1520, %v1519
    %v1524 = vpack.c.bf16 %v1522, %v1521
    %v1525 = vadd.f32 %v1202, %v999
    %v1526 = vadd.f32 %v1206, %v1002
    %v1527 = vadd.f32 %v1212, %v1007
    %v1528 = vadd.f32 %v1216, %v1010
    %v1529 = vmax.f32 %v1525, 0.0
    %v1530 = vmax.f32 %v1526, 0.0
    %v1531 = vmax.f32 %v1527, 0.0
    %v1532 = vmax.f32 %v1528, 0.0
    %v1533 = vpack.c.bf16 %v1530, %v1529
    %v1534 = vpack.c.bf16 %v1532, %v1531
    %v1535 = vadd.f32 %v1204, %v999
    %v1536 = vadd.f32 %v1208, %v1002
    %v1537 = vadd.f32 %v1214, %v1007
    %v1538 = vadd.f32 %v1218, %v1010
    %v1539 = vmax.f32 %v1535, 0.0
    %v1540 = vmax.f32 %v1536, 0.0
    %v1541 = vmax.f32 %v1537, 0.0
    %v1542 = vmax.f32 %v1538, 0.0
    %v1543 = vpack.c.bf16 %v1540, %v1539
    %v1544 = vpack.c.bf16 %v1542, %v1541
    %v1545 = vadd.f32 %v1255, %v999
    %v1546 = vadd.f32 %v1259, %v1002
    %v1547 = vadd.f32 %v1265, %v1007
    %v1548 = vadd.f32 %v1269, %v1010
    %v1549 = vmax.f32 %v1545, 0.0
    %v1550 = vmax.f32 %v1546, 0.0
    %v1551 = vmax.f32 %v1547, 0.0
    %v1552 = vmax.f32 %v1548, 0.0
    %v1553 = vpack.c.bf16 %v1550, %v1549
    %v1554 = vpack.c.bf16 %v1552, %v1551
    %v1555 = vadd.f32 %v1257, %v999
    %v1556 = vadd.f32 %v1261, %v1002
    %v1557 = vadd.f32 %v1267, %v1007
    %v1558 = vadd.f32 %v1271, %v1010
    %v1559 = vmax.f32 %v1555, 0.0
    %v1560 = vmax.f32 %v1556, 0.0
    %v1561 = vmax.f32 %v1557, 0.0
    %v1562 = vmax.f32 %v1558, 0.0
    %v1563 = vpack.c.bf16 %v1560, %v1559
    %v1564 = vpack.c.bf16 %v1562, %v1561
    %v1565 = vadd.f32 %v1308, %v999
    %v1566 = vadd.f32 %v1312, %v1002
    %v1567 = vadd.f32 %v1318, %v1007
    %v1568 = vadd.f32 %v1322, %v1010
    %v1569 = vmax.f32 %v1565, 0.0
    %v1570 = vmax.f32 %v1566, 0.0
    %v1571 = vmax.f32 %v1567, 0.0
    %v1572 = vmax.f32 %v1568, 0.0
    %v1573 = vpack.c.bf16 %v1570, %v1569
    %v1574 = vpack.c.bf16 %v1572, %v1571
    %v1575 = vadd.f32 %v1310, %v999
    %v1576 = vadd.f32 %v1314, %v1002
    %v1577 = vadd.f32 %v1320, %v1007
    %v1578 = vadd.f32 %v1324, %v1010
    %v1579 = vmax.f32 %v1575, 0.0
    %v1580 = vmax.f32 %v1576, 0.0
    %v1581 = vmax.f32 %v1577, 0.0
    %v1582 = vmax.f32 %v1578, 0.0
    %v1583 = vpack.c.bf16 %v1580, %v1579
    %v1584 = vpack.c.bf16 %v1582, %v1581
    %v1585 = vadd.f32 %v1361, %v999
    %v1586 = vadd.f32 %v1365, %v1002
    %v1587 = vadd.f32 %v1371, %v1007
    %v1588 = vadd.f32 %v1375, %v1010
    %v1589 = vmax.f32 %v1585, 0.0
    %v1590 = vmax.f32 %v1586, 0.0
    %v1591 = vmax.f32 %v1587, 0.0
    %v1592 = vmax.f32 %v1588, 0.0
    %v1593 = vpack.c.bf16 %v1590, %v1589
    %v1594 = vpack.c.bf16 %v1592, %v1591
    %v1595 = vadd.f32 %v1363, %v999
    %v1596 = vadd.f32 %v1367, %v1002
    %v1597 = vadd.f32 %v1373, %v1007
    %v1598 = vadd.f32 %v1377, %v1010
    %v1599 = vmax.f32 %v1595, 0.0
    %v1600 = vmax.f32 %v1596, 0.0
    %v1601 = vmax.f32 %v1597, 0.0
    %v1602 = vmax.f32 %v1598, 0.0
    %v1603 = vpack.c.bf16 %v1600, %v1599
    %v1604 = vpack.c.bf16 %v1602, %v1601
    %v1605 = vadd.f32 %v1414, %v999
    %v1606 = vadd.f32 %v1418, %v1002
    %v1607 = vadd.f32 %v1424, %v1007
    %v1608 = vadd.f32 %v1428, %v1010
    %v1609 = vmax.f32 %v1605, 0.0
    %v1610 = vmax.f32 %v1606, 0.0
    %v1611 = vmax.f32 %v1607, 0.0
    %v1612 = vmax.f32 %v1608, 0.0
    %v1613 = vpack.c.bf16 %v1610, %v1609
    %v1614 = vpack.c.bf16 %v1612, %v1611
    %v1615 = vadd.f32 %v1416, %v999
    %v1616 = vadd.f32 %v1420, %v1002
    %v1617 = vadd.f32 %v1426, %v1007
    %v1618 = vadd.f32 %v1430, %v1010
    %v1619 = vmax.f32 %v1615, 0.0
    %v1620 = vmax.f32 %v1616, 0.0
    %v1621 = vmax.f32 %v1617, 0.0
    %v1622 = vmax.f32 %v1618, 0.0
    %v1623 = vpack.c.bf16 %v1620, %v1619
    %v1624 = vpack.c.bf16 %v1622, %v1621
    %v1625 = vadd.f32 %v1467, %v999
    %v1626 = vadd.f32 %v1471, %v1002
    %v1627 = vadd.f32 %v1477, %v1007
    %v1628 = vadd.f32 %v1481, %v1010
    %v1629 = vmax.f32 %v1625, 0.0
    %v1630 = vmax.f32 %v1626, 0.0
    %v1631 = vmax.f32 %v1627, 0.0
    %v1632 = vmax.f32 %v1628, 0.0
    %v1633 = vpack.c.bf16 %v1630, %v1629
    %v1634 = vpack.c.bf16 %v1632, %v1631
    %v1635 = vadd.f32 %v1469, %v999
    %v1636 = vadd.f32 %v1473, %v1002
    %v1637 = vadd.f32 %v1479, %v1007
    %v1638 = vadd.f32 %v1483, %v1010
    %v1639 = vmax.f32 %v1635, 0.0
    %v1640 = vmax.f32 %v1636, 0.0
    %v1641 = vmax.f32 %v1637, 0.0
    %v1642 = vmax.f32 %v1638, 0.0
    %v1643 = vpack.c.bf16 %v1640, %v1639
    %v1644 = vpack.c.bf16 %v1642, %v1641
    %v1649 = vunpack.c.l.b16 %v63
    %v1650 = vunpack.c.l.b16 %v64
    %v1651 = vunpack.c.l.b16 %v65
    %v1652 = vunpack.c.l.b16 %v66
    %v1653 = vpack.c.b16 %v1650, %v1649
    %v1654 = vpack.c.b16 %v1652, %v1651
    %v1656 = vsel %vm957, %v1653, 0
    %v1659 = vsel %vm957, %v1654, 0
    %1661 = vmatprep.subr.bf16.mxu0 0
    %1662 = vmatpush1.bf16.msra.mxu0 0
    %1663 = vmatprep.subr.bf16.mxu0 0
    %1664 = vmatpush1.bf16.msra.mxu0 0
    %1665 = vmatprep.subr.bf16.mxu0 0
    %1666 = vmatpush1.bf16.msra.mxu0 0
    %1667 = vmatprep.subr.bf16.mxu0 0
    %1668 = vmatpush1.bf16.msra.mxu0 0
    %1669 = vmatprep.subr.bf16.mxu0 0
    %1670 = vmatpush1.bf16.msra.mxu0 0
    %1671 = vmatprep.subr.bf16.mxu0 0
    %1672 = vmatpush1.bf16.msra.mxu0 0
    %1673 = vmatprep.subr.bf16.mxu0 %v1504
    %1674 = vmatpush1.bf16.msra.mxu0 %v1494
    %1675 = vmatprep.subr.bf16.mxu0 %v1503
    %1676 = vmatpush1.bf16.msra.mxu0 %v1493
    %1677 = vmatprep.subr.bf16.mxu0 0
    %1678 = vmatpush2.bf16.msra.mxu0 0
    %1679 = vmatprep.subr.bf16.mxu0 0
    %1680 = vmatpush2.bf16.msra.mxu0 0
    %1681 = vmatprep.subr.bf16.mxu0 0
    %1682 = vmatpush2.bf16.msra.mxu0 0
    %1683 = vmatprep.subr.bf16.mxu0 0
    %1684 = vmatpush2.bf16.msra.mxu0 0
    %1685 = vmatprep.subr.bf16.mxu0 0
    %1686 = vmatpush2.bf16.msra.mxu0 0
    %1687 = vmatprep.subr.bf16.mxu0 0
    %1688 = vmatpush2.bf16.msra.mxu0 0
    %1689 = vmatprep.subr.bf16.mxu0 0
    %1690 = vmatpush2.bf16.msra.mxu0 0
    %1691 = vmatprep.subr.bf16.mxu0 0
    %1692 = vmatpush2.bf16.msra.mxu0 0
    %1693 = vmatprep.mubr.bf16.mxu0 0
    %1694 = vmatmul.mubr.bf16.gmra.mxu0 %v1656
    %v1695 = vpop.f32.mrf.mxu0
    %v1696 = vadd.f32 0.0, %v1695
    %v1697 = vpop.f32.mrf.mxu0
    %v1698 = vadd.f32 0.0, %v1697
    %v1699 = vpop.f32.mrf.mxu0
    %v1700 = vadd.f32 0.0, %v1699
    %v1701 = vpop.f32.mrf.mxu0
    %v1702 = vadd.f32 0.0, %v1701
    %1703 = vmatprep.mubr.bf16.mxu0 0
    %1704 = vmatmul.mubr.bf16.gmra.mxu0 %v1659
    %v1705 = vpop.f32.mrf.mxu0
    %v1706 = vadd.f32 0.0, %v1705
    %v1707 = vpop.f32.mrf.mxu0
    %v1708 = vadd.f32 0.0, %v1707
    %v1709 = vpop.f32.mrf.mxu0
    %v1710 = vadd.f32 0.0, %v1709
    %v1711 = vpop.f32.mrf.mxu0
    %v1712 = vadd.f32 0.0, %v1711
    %1713 = vdwg.mxu0
    %1714 = vmatprep.subr.bf16.mxu0 0
    %1715 = vmatpush1.bf16.msra.mxu0 0
    %1716 = vmatprep.subr.bf16.mxu0 0
    %1717 = vmatpush1.bf16.msra.mxu0 0
    %1718 = vmatprep.subr.bf16.mxu0 0
    %1719 = vmatpush1.bf16.msra.mxu0 0
    %1720 = vmatprep.subr.bf16.mxu0 0
    %1721 = vmatpush1.bf16.msra.mxu0 0
    %1722 = vmatprep.subr.bf16.mxu0 0
    %1723 = vmatpush1.bf16.msra.mxu0 0
    %1724 = vmatprep.subr.bf16.mxu0 0
    %1725 = vmatpush1.bf16.msra.mxu0 0
    %1726 = vmatprep.subr.bf16.mxu0 %v1524
    %1727 = vmatpush1.bf16.msra.mxu0 %v1514
    %1728 = vmatprep.subr.bf16.mxu0 %v1523
    %1729 = vmatpush1.bf16.msra.mxu0 %v1513
    %1730 = vmatprep.subr.bf16.mxu0 0
    %1731 = vmatpush2.bf16.msra.mxu0 0
    %1732 = vmatprep.subr.bf16.mxu0 0
    %1733 = vmatpush2.bf16.msra.mxu0 0
    %1734 = vmatprep.subr.bf16.mxu0 0
    %1735 = vmatpush2.bf16.msra.mxu0 0
    %1736 = vmatprep.subr.bf16.mxu0 0
    %1737 = vmatpush2.bf16.msra.mxu0 0
    %1738 = vmatprep.subr.bf16.mxu0 0
    %1739 = vmatpush2.bf16.msra.mxu0 0
    %1740 = vmatprep.subr.bf16.mxu0 0
    %1741 = vmatpush2.bf16.msra.mxu0 0
    %1742 = vmatprep.subr.bf16.mxu0 0
    %1743 = vmatpush2.bf16.msra.mxu0 0
    %1744 = vmatprep.subr.bf16.mxu0 0
    %1745 = vmatpush2.bf16.msra.mxu0 0
    %1746 = vmatprep.mubr.bf16.mxu0 0
    %1747 = vmatmul.mubr.bf16.gmra.mxu0 %v1656
    %v1748 = vpop.f32.mrf.mxu0
    %v1749 = vadd.f32 0.0, %v1748
    %v1750 = vpop.f32.mrf.mxu0
    %v1751 = vadd.f32 0.0, %v1750
    %v1752 = vpop.f32.mrf.mxu0
    %v1753 = vadd.f32 0.0, %v1752
    %v1754 = vpop.f32.mrf.mxu0
    %v1755 = vadd.f32 0.0, %v1754
    %1756 = vmatprep.mubr.bf16.mxu0 0
    %1757 = vmatmul.mubr.bf16.gmra.mxu0 %v1659
    %v1758 = vpop.f32.mrf.mxu0
    %v1759 = vadd.f32 0.0, %v1758
    %v1760 = vpop.f32.mrf.mxu0
    %v1761 = vadd.f32 0.0, %v1760
    %v1762 = vpop.f32.mrf.mxu0
    %v1763 = vadd.f32 0.0, %v1762
    %v1764 = vpop.f32.mrf.mxu0
    %v1765 = vadd.f32 0.0, %v1764
    %1766 = vdwg.mxu0
    %1767 = vmatprep.subr.bf16.mxu0 0
    %1768 = vmatpush1.bf16.msra.mxu0 0
    %1769 = vmatprep.subr.bf16.mxu0 0
    %1770 = vmatpush1.bf16.msra.mxu0 0
    %1771 = vmatprep.subr.bf16.mxu0 0
    %1772 = vmatpush1.bf16.msra.mxu0 0
    %1773 = vmatprep.subr.bf16.mxu0 0
    %1774 = vmatpush1.bf16.msra.mxu0 0
    %1775 = vmatprep.subr.bf16.mxu0 0
    %1776 = vmatpush1.bf16.msra.mxu0 0
    %1777 = vmatprep.subr.bf16.mxu0 0
    %1778 = vmatpush1.bf16.msra.mxu0 0
    %1779 = vmatprep.subr.bf16.mxu0 %v1544
    %1780 = vmatpush1.bf16.msra.mxu0 %v1534
    %1781 = vmatprep.subr.bf16.mxu0 %v1543
    %1782 = vmatpush1.bf16.msra.mxu0 %v1533
    %1783 = vmatprep.subr.bf16.mxu0 0
    %1784 = vmatpush2.bf16.msra.mxu0 0
    %1785 = vmatprep.subr.bf16.mxu0 0
    %1786 = vmatpush2.bf16.msra.mxu0 0
    %1787 = vmatprep.subr.bf16.mxu0 0
    %1788 = vmatpush2.bf16.msra.mxu0 0
    %1789 = vmatprep.subr.bf16.mxu0 0
    %1790 = vmatpush2.bf16.msra.mxu0 0
    %1791 = vmatprep.subr.bf16.mxu0 0
    %1792 = vmatpush2.bf16.msra.mxu0 0
    %1793 = vmatprep.subr.bf16.mxu0 0
    %1794 = vmatpush2.bf16.msra.mxu0 0
    %1795 = vmatprep.subr.bf16.mxu0 0
    %1796 = vmatpush2.bf16.msra.mxu0 0
    %1797 = vmatprep.subr.bf16.mxu0 0
    %1798 = vmatpush2.bf16.msra.mxu0 0
    %1799 = vmatprep.mubr.bf16.mxu0 0
    %1800 = vmatmul.mubr.bf16.gmra.mxu0 %v1656
    %v1801 = vpop.f32.mrf.mxu0
    %v1802 = vadd.f32 0.0, %v1801
    %v1803 = vpop.f32.mrf.mxu0
    %v1804 = vadd.f32 0.0, %v1803
    %v1805 = vpop.f32.mrf.mxu0
    %v1806 = vadd.f32 0.0, %v1805
    %v1807 = vpop.f32.mrf.mxu0
    %v1808 = vadd.f32 0.0, %v1807
    %1809 = vmatprep.mubr.bf16.mxu0 0
    %1810 = vmatmul.mubr.bf16.gmra.mxu0 %v1659
    %v1811 = vpop.f32.mrf.mxu0
    %v1812 = vadd.f32 0.0, %v1811
    %v1813 = vpop.f32.mrf.mxu0
    %v1814 = vadd.f32 0.0, %v1813
    %v1815 = vpop.f32.mrf.mxu0
    %v1816 = vadd.f32 0.0, %v1815
    %v1817 = vpop.f32.mrf.mxu0
    %v1818 = vadd.f32 0.0, %v1817
    %1819 = vdwg.mxu0
    %1820 = vmatprep.subr.bf16.mxu0 0
    %1821 = vmatpush1.bf16.msra.mxu0 0
    %1822 = vmatprep.subr.bf16.mxu0 0
    %1823 = vmatpush1.bf16.msra.mxu0 0
    %1824 = vmatprep.subr.bf16.mxu0 0
    %1825 = vmatpush1.bf16.msra.mxu0 0
    %1826 = vmatprep.subr.bf16.mxu0 0
    %1827 = vmatpush1.bf16.msra.mxu0 0
    %1828 = vmatprep.subr.bf16.mxu0 0
    %1829 = vmatpush1.bf16.msra.mxu0 0
    %1830 = vmatprep.subr.bf16.mxu0 0
    %1831 = vmatpush1.bf16.msra.mxu0 0
    %1832 = vmatprep.subr.bf16.mxu0 %v1564
    %1833 = vmatpush1.bf16.msra.mxu0 %v1554
    %1834 = vmatprep.subr.bf16.mxu0 %v1563
    %1835 = vmatpush1.bf16.msra.mxu0 %v1553
    %1836 = vmatprep.subr.bf16.mxu0 0
    %1837 = vmatpush2.bf16.msra.mxu0 0
    %1838 = vmatprep.subr.bf16.mxu0 0
    %1839 = vmatpush2.bf16.msra.mxu0 0
    %1840 = vmatprep.subr.bf16.mxu0 0
    %1841 = vmatpush2.bf16.msra.mxu0 0
    %1842 = vmatprep.subr.bf16.mxu0 0
    %1843 = vmatpush2.bf16.msra.mxu0 0
    %1844 = vmatprep.subr.bf16.mxu0 0
    %1845 = vmatpush2.bf16.msra.mxu0 0
    %1846 = vmatprep.subr.bf16.mxu0 0
    %1847 = vmatpush2.bf16.msra.mxu0 0
    %1848 = vmatprep.subr.bf16.mxu0 0
    %1849 = vmatpush2.bf16.msra.mxu0 0
    %1850 = vmatprep.subr.bf16.mxu0 0
    %1851 = vmatpush2.bf16.msra.mxu0 0
    %1852 = vmatprep.mubr.bf16.mxu0 0
    %1853 = vmatmul.mubr.bf16.gmra.mxu0 %v1656
    %v1854 = vpop.f32.mrf.mxu0
    %v1855 = vadd.f32 0.0, %v1854
    %v1856 = vpop.f32.mrf.mxu0
    %v1857 = vadd.f32 0.0, %v1856
    %v1858 = vpop.f32.mrf.mxu0
    %v1859 = vadd.f32 0.0, %v1858
    %v1860 = vpop.f32.mrf.mxu0
    %v1861 = vadd.f32 0.0, %v1860
    %1862 = vmatprep.mubr.bf16.mxu0 0
    %1863 = vmatmul.mubr.bf16.gmra.mxu0 %v1659
    %v1864 = vpop.f32.mrf.mxu0
    %v1865 = vadd.f32 0.0, %v1864
    %v1866 = vpop.f32.mrf.mxu0
    %v1867 = vadd.f32 0.0, %v1866
    %v1868 = vpop.f32.mrf.mxu0
    %v1869 = vadd.f32 0.0, %v1868
    %v1870 = vpop.f32.mrf.mxu0
    %v1871 = vadd.f32 0.0, %v1870
    %1872 = vdwg.mxu0
    %1873 = vmatprep.subr.bf16.mxu0 0
    %1874 = vmatpush1.bf16.msra.mxu0 0
    %1875 = vmatprep.subr.bf16.mxu0 0
    %1876 = vmatpush1.bf16.msra.mxu0 0
    %1877 = vmatprep.subr.bf16.mxu0 0
    %1878 = vmatpush1.bf16.msra.mxu0 0
    %1879 = vmatprep.subr.bf16.mxu0 0
    %1880 = vmatpush1.bf16.msra.mxu0 0
    %1881 = vmatprep.subr.bf16.mxu0 0
    %1882 = vmatpush1.bf16.msra.mxu0 0
    %1883 = vmatprep.subr.bf16.mxu0 0
    %1884 = vmatpush1.bf16.msra.mxu0 0
    %1885 = vmatprep.subr.bf16.mxu0 %v1584
    %1886 = vmatpush1.bf16.msra.mxu0 %v1574
    %1887 = vmatprep.subr.bf16.mxu0 %v1583
    %1888 = vmatpush1.bf16.msra.mxu0 %v1573
    %1889 = vmatprep.subr.bf16.mxu0 0
    %1890 = vmatpush2.bf16.msra.mxu0 0
    %1891 = vmatprep.subr.bf16.mxu0 0
    %1892 = vmatpush2.bf16.msra.mxu0 0
    %1893 = vmatprep.subr.bf16.mxu0 0
    %1894 = vmatpush2.bf16.msra.mxu0 0
    %1895 = vmatprep.subr.bf16.mxu0 0
    %1896 = vmatpush2.bf16.msra.mxu0 0
    %1897 = vmatprep.subr.bf16.mxu0 0
    %1898 = vmatpush2.bf16.msra.mxu0 0
    %1899 = vmatprep.subr.bf16.mxu0 0
    %1900 = vmatpush2.bf16.msra.mxu0 0
    %1901 = vmatprep.subr.bf16.mxu0 0
    %1902 = vmatpush2.bf16.msra.mxu0 0
    %1903 = vmatprep.subr.bf16.mxu0 0
    %1904 = vmatpush2.bf16.msra.mxu0 0
    %1905 = vmatprep.mubr.bf16.mxu0 0
    %1906 = vmatmul.mubr.bf16.gmra.mxu0 %v1656
    %v1907 = vpop.f32.mrf.mxu0
    %v1908 = vadd.f32 0.0, %v1907
    %v1909 = vpop.f32.mrf.mxu0
    %v1910 = vadd.f32 0.0, %v1909
    %v1911 = vpop.f32.mrf.mxu0
    %v1912 = vadd.f32 0.0, %v1911
    %v1913 = vpop.f32.mrf.mxu0
    %v1914 = vadd.f32 0.0, %v1913
    %1915 = vmatprep.mubr.bf16.mxu0 0
    %1916 = vmatmul.mubr.bf16.gmra.mxu0 %v1659
    %v1917 = vpop.f32.mrf.mxu0
    %v1918 = vadd.f32 0.0, %v1917
    %v1919 = vpop.f32.mrf.mxu0
    %v1920 = vadd.f32 0.0, %v1919
    %v1921 = vpop.f32.mrf.mxu0
    %v1922 = vadd.f32 0.0, %v1921
    %v1923 = vpop.f32.mrf.mxu0
    %v1924 = vadd.f32 0.0, %v1923
    %1925 = vdwg.mxu0
    %1926 = vmatprep.subr.bf16.mxu0 0
    %1927 = vmatpush1.bf16.msra.mxu0 0
    %1928 = vmatprep.subr.bf16.mxu0 0
    %1929 = vmatpush1.bf16.msra.mxu0 0
    %1930 = vmatprep.subr.bf16.mxu0 0
    %1931 = vmatpush1.bf16.msra.mxu0 0
    %1932 = vmatprep.subr.bf16.mxu0 0
    %1933 = vmatpush1.bf16.msra.mxu0 0
    %1934 = vmatprep.subr.bf16.mxu0 0
    %1935 = vmatpush1.bf16.msra.mxu0 0
    %1936 = vmatprep.subr.bf16.mxu0 0
    %1937 = vmatpush1.bf16.msra.mxu0 0
    %1938 = vmatprep.subr.bf16.mxu0 %v1604
    %1939 = vmatpush1.bf16.msra.mxu0 %v1594
    %1940 = vmatprep.subr.bf16.mxu0 %v1603
    %1941 = vmatpush1.bf16.msra.mxu0 %v1593
    %1942 = vmatprep.subr.bf16.mxu0 0
    %1943 = vmatpush2.bf16.msra.mxu0 0
    %1944 = vmatprep.subr.bf16.mxu0 0
    %1945 = vmatpush2.bf16.msra.mxu0 0
    %1946 = vmatprep.subr.bf16.mxu0 0
    %1947 = vmatpush2.bf16.msra.mxu0 0
    %1948 = vmatprep.subr.bf16.mxu0 0
    %1949 = vmatpush2.bf16.msra.mxu0 0
    %1950 = vmatprep.subr.bf16.mxu0 0
    %1951 = vmatpush2.bf16.msra.mxu0 0
    %1952 = vmatprep.subr.bf16.mxu0 0
    %1953 = vmatpush2.bf16.msra.mxu0 0
    %1954 = vmatprep.subr.bf16.mxu0 0
    %1955 = vmatpush2.bf16.msra.mxu0 0
    %1956 = vmatprep.subr.bf16.mxu0 0
    %1957 = vmatpush2.bf16.msra.mxu0 0
    %1958 = vmatprep.mubr.bf16.mxu0 0
    %1959 = vmatmul.mubr.bf16.gmra.mxu0 %v1656
    %v1960 = vpop.f32.mrf.mxu0
    %v1961 = vadd.f32 0.0, %v1960
    %v1962 = vpop.f32.mrf.mxu0
    %v1963 = vadd.f32 0.0, %v1962
    %v1964 = vpop.f32.mrf.mxu0
    %v1965 = vadd.f32 0.0, %v1964
    %v1966 = vpop.f32.mrf.mxu0
    %v1967 = vadd.f32 0.0, %v1966
    %1968 = vmatprep.mubr.bf16.mxu0 0
    %1969 = vmatmul.mubr.bf16.gmra.mxu0 %v1659
    %v1970 = vpop.f32.mrf.mxu0
    %v1971 = vadd.f32 0.0, %v1970
    %v1972 = vpop.f32.mrf.mxu0
    %v1973 = vadd.f32 0.0, %v1972
    %v1974 = vpop.f32.mrf.mxu0
    %v1975 = vadd.f32 0.0, %v1974
    %v1976 = vpop.f32.mrf.mxu0
    %v1977 = vadd.f32 0.0, %v1976
    %1978 = vdwg.mxu0
    %1979 = vmatprep.subr.bf16.mxu0 0
    %1980 = vmatpush1.bf16.msra.mxu0 0
    %1981 = vmatprep.subr.bf16.mxu0 0
    %1982 = vmatpush1.bf16.msra.mxu0 0
    %1983 = vmatprep.subr.bf16.mxu0 0
    %1984 = vmatpush1.bf16.msra.mxu0 0
    %1985 = vmatprep.subr.bf16.mxu0 0
    %1986 = vmatpush1.bf16.msra.mxu0 0
    %1987 = vmatprep.subr.bf16.mxu0 0
    %1988 = vmatpush1.bf16.msra.mxu0 0
    %1989 = vmatprep.subr.bf16.mxu0 0
    %1990 = vmatpush1.bf16.msra.mxu0 0
    %1991 = vmatprep.subr.bf16.mxu0 %v1624
    %1992 = vmatpush1.bf16.msra.mxu0 %v1614
    %1993 = vmatprep.subr.bf16.mxu0 %v1623
    %1994 = vmatpush1.bf16.msra.mxu0 %v1613
    %1995 = vmatprep.subr.bf16.mxu0 0
    %1996 = vmatpush2.bf16.msra.mxu0 0
    %1997 = vmatprep.subr.bf16.mxu0 0
    %1998 = vmatpush2.bf16.msra.mxu0 0
    %1999 = vmatprep.subr.bf16.mxu0 0
    %2000 = vmatpush2.bf16.msra.mxu0 0
    %2001 = vmatprep.subr.bf16.mxu0 0
    %2002 = vmatpush2.bf16.msra.mxu0 0
    %2003 = vmatprep.subr.bf16.mxu0 0
    %2004 = vmatpush2.bf16.msra.mxu0 0
    %2005 = vmatprep.subr.bf16.mxu0 0
    %2006 = vmatpush2.bf16.msra.mxu0 0
    %2007 = vmatprep.subr.bf16.mxu0 0
    %2008 = vmatpush2.bf16.msra.mxu0 0
    %2009 = vmatprep.subr.bf16.mxu0 0
    %2010 = vmatpush2.bf16.msra.mxu0 0
    %2011 = vmatprep.mubr.bf16.mxu0 0
    %2012 = vmatmul.mubr.bf16.gmra.mxu0 %v1656
    %v2013 = vpop.f32.mrf.mxu0
    %v2014 = vadd.f32 0.0, %v2013
    %v2015 = vpop.f32.mrf.mxu0
    %v2016 = vadd.f32 0.0, %v2015
    %v2017 = vpop.f32.mrf.mxu0
    %v2018 = vadd.f32 0.0, %v2017
    %v2019 = vpop.f32.mrf.mxu0
    %v2020 = vadd.f32 0.0, %v2019
    %2021 = vmatprep.mubr.bf16.mxu0 0
    %2022 = vmatmul.mubr.bf16.gmra.mxu0 %v1659
    %v2023 = vpop.f32.mrf.mxu0
    %v2024 = vadd.f32 0.0, %v2023
    %v2025 = vpop.f32.mrf.mxu0
    %v2026 = vadd.f32 0.0, %v2025
    %v2027 = vpop.f32.mrf.mxu0
    %v2028 = vadd.f32 0.0, %v2027
    %v2029 = vpop.f32.mrf.mxu0
    %v2030 = vadd.f32 0.0, %v2029
    %2031 = vdwg.mxu0
    %2032 = vmatprep.subr.bf16.mxu0 0
    %2033 = vmatpush1.bf16.msra.mxu0 0
    %2034 = vmatprep.subr.bf16.mxu0 0
    %2035 = vmatpush1.bf16.msra.mxu0 0
    %2036 = vmatprep.subr.bf16.mxu0 0
    %2037 = vmatpush1.bf16.msra.mxu0 0
    %2038 = vmatprep.subr.bf16.mxu0 0
    %2039 = vmatpush1.bf16.msra.mxu0 0
    %2040 = vmatprep.subr.bf16.mxu0 0
    %2041 = vmatpush1.bf16.msra.mxu0 0
    %2042 = vmatprep.subr.bf16.mxu0 0
    %2043 = vmatpush1.bf16.msra.mxu0 0
    %2044 = vmatprep.subr.bf16.mxu0 %v1644
    %2045 = vmatpush1.bf16.msra.mxu0 %v1634
    %2046 = vmatprep.subr.bf16.mxu0 %v1643
    %2047 = vmatpush1.bf16.msra.mxu0 %v1633
    %2048 = vmatprep.subr.bf16.mxu0 0
    %2049 = vmatpush2.bf16.msra.mxu0 0
    %2050 = vmatprep.subr.bf16.mxu0 0
    %2051 = vmatpush2.bf16.msra.mxu0 0
    %2052 = vmatprep.subr.bf16.mxu0 0
    %2053 = vmatpush2.bf16.msra.mxu0 0
    %2054 = vmatprep.subr.bf16.mxu0 0
    %2055 = vmatpush2.bf16.msra.mxu0 0
    %2056 = vmatprep.subr.bf16.mxu0 0
    %2057 = vmatpush2.bf16.msra.mxu0 0
    %2058 = vmatprep.subr.bf16.mxu0 0
    %2059 = vmatpush2.bf16.msra.mxu0 0
    %2060 = vmatprep.subr.bf16.mxu0 0
    %2061 = vmatpush2.bf16.msra.mxu0 0
    %2062 = vmatprep.subr.bf16.mxu0 0
    %2063 = vmatpush2.bf16.msra.mxu0 0
    %2064 = vmatprep.mubr.bf16.mxu0 0
    %2065 = vmatmul.mubr.bf16.gmra.mxu0 %v1656
    %v2066 = vpop.f32.mrf.mxu0
    %v2067 = vadd.f32 0.0, %v2066
    %v2068 = vpop.f32.mrf.mxu0
    %v2069 = vadd.f32 0.0, %v2068
    %v2070 = vpop.f32.mrf.mxu0
    %v2071 = vadd.f32 0.0, %v2070
    %v2072 = vpop.f32.mrf.mxu0
    %v2073 = vadd.f32 0.0, %v2072
    %2074 = vmatprep.mubr.bf16.mxu0 0
    %2075 = vmatmul.mubr.bf16.gmra.mxu0 %v1659
    %v2076 = vpop.f32.mrf.mxu0
    %v2077 = vadd.f32 0.0, %v2076
    %v2078 = vpop.f32.mrf.mxu0
    %v2079 = vadd.f32 0.0, %v2078
    %v2080 = vpop.f32.mrf.mxu0
    %v2081 = vadd.f32 0.0, %v2080
    %v2082 = vpop.f32.mrf.mxu0
    %v2083 = vadd.f32 0.0, %v2082
    %2084 = vdwg.mxu0
    %v2085 = vmax.f32 %v1696, 0.0
    %v2086 = vmax.f32 %v1698, 0.0
    %v2087 = vmax.f32 %v1749, 0.0
    %v2088 = vmax.f32 %v1751, 0.0
    %v2089 = vmax.f32 %v1802, 0.0
    %v2090 = vmax.f32 %v1804, 0.0
    %v2091 = vmax.f32 %v1855, 0.0
    %v2092 = vmax.f32 %v1857, 0.0
    %v2093 = vmax.f32 %v1908, 0.0
    %v2094 = vmax.f32 %v1910, 0.0
    %v2095 = vmax.f32 %v1961, 0.0
    %v2096 = vmax.f32 %v1963, 0.0
    %v2097 = vmax.f32 %v2014, 0.0
    %v2098 = vmax.f32 %v2016, 0.0
    %v2099 = vmax.f32 %v2067, 0.0
    %v2100 = vmax.f32 %v2069, 0.0
    %v2101 = vmax.f32 %v1700, 0.0
    %v2102 = vmax.f32 %v1702, 0.0
    %v2103 = vmax.f32 %v1753, 0.0
    %v2104 = vmax.f32 %v1755, 0.0
    %v2105 = vmax.f32 %v1806, 0.0
    %v2106 = vmax.f32 %v1808, 0.0
    %v2107 = vmax.f32 %v1859, 0.0
    %v2108 = vmax.f32 %v1861, 0.0
    %v2109 = vmax.f32 %v1912, 0.0
    %v2110 = vmax.f32 %v1914, 0.0
    %v2111 = vmax.f32 %v1965, 0.0
    %v2112 = vmax.f32 %v1967, 0.0
    %v2113 = vmax.f32 %v2018, 0.0
    %v2114 = vmax.f32 %v2020, 0.0
    %v2115 = vmax.f32 %v2071, 0.0
    %v2116 = vmax.f32 %v2073, 0.0
    %v2117 = vmax.f32 %v1706, 0.0
    %v2118 = vmax.f32 %v1708, 0.0
    %v2119 = vmax.f32 %v1759, 0.0
    %v2120 = vmax.f32 %v1761, 0.0
    %v2121 = vmax.f32 %v1812, 0.0
    %v2122 = vmax.f32 %v1814, 0.0
    %v2123 = vmax.f32 %v1865, 0.0
    %v2124 = vmax.f32 %v1867, 0.0
    %v2125 = vmax.f32 %v1918, 0.0
    %v2126 = vmax.f32 %v1920, 0.0
    %v2127 = vmax.f32 %v1971, 0.0
    %v2128 = vmax.f32 %v1973, 0.0
    %v2129 = vmax.f32 %v2024, 0.0
    %v2130 = vmax.f32 %v2026, 0.0
    %v2131 = vmax.f32 %v2077, 0.0
    %v2132 = vmax.f32 %v2079, 0.0
    %v2133 = vmax.f32 %v1710, 0.0
    %v2134 = vmax.f32 %v1712, 0.0
    %v2135 = vmax.f32 %v1763, 0.0
    %v2136 = vmax.f32 %v1765, 0.0
    %v2137 = vmax.f32 %v1816, 0.0
    %v2138 = vmax.f32 %v1818, 0.0
    %v2139 = vmax.f32 %v1869, 0.0
    %v2140 = vmax.f32 %v1871, 0.0
    %v2141 = vmax.f32 %v1922, 0.0
    %v2142 = vmax.f32 %v1924, 0.0
    %v2143 = vmax.f32 %v1975, 0.0
    %v2144 = vmax.f32 %v1977, 0.0
    %v2145 = vmax.f32 %v2028, 0.0
    %v2146 = vmax.f32 %v2030, 0.0
    %v2147 = vmax.f32 %v2081, 0.0
    %v2148 = vmax.f32 %v2083, 0.0
    %v2149 = vmul.f32 %v2085, %v760
    %v2150 = vmul.f32 %v2086, %v764
    %v2151 = vmul.f32 %v2087, %v768
    %v2152 = vmul.f32 %v2088, %v772
    %v2153 = vmul.f32 %v2089, %v776
    %v2154 = vmul.f32 %v2090, %v780
    %v2155 = vmul.f32 %v2091, %v784
    %v2156 = vmul.f32 %v2092, %v788
    %v2157 = vmul.f32 %v2093, %v792
    %v2158 = vmul.f32 %v2094, %v796
    %v2159 = vmul.f32 %v2095, %v800
    %v2160 = vmul.f32 %v2096, %v804
    %v2161 = vmul.f32 %v2097, %v808
    %v2162 = vmul.f32 %v2098, %v812
    %v2163 = vmul.f32 %v2099, %v816
    %v2164 = vmul.f32 %v2100, %v820
    %v2165 = vmul.f32 %v2101, %v760
    %v2166 = vmul.f32 %v2102, %v764
    %v2167 = vmul.f32 %v2103, %v768
    %v2168 = vmul.f32 %v2104, %v772
    %v2169 = vmul.f32 %v2105, %v776
    %v2170 = vmul.f32 %v2106, %v780
    %v2171 = vmul.f32 %v2107, %v784
    %v2172 = vmul.f32 %v2108, %v788
    %v2173 = vmul.f32 %v2109, %v792
    %v2174 = vmul.f32 %v2110, %v796
    %v2175 = vmul.f32 %v2111, %v800
    %v2176 = vmul.f32 %v2112, %v804
    %v2177 = vmul.f32 %v2113, %v808
    %v2178 = vmul.f32 %v2114, %v812
    %v2179 = vmul.f32 %v2115, %v816
    %v2180 = vmul.f32 %v2116, %v820
    %v2181 = vmul.f32 %v2117, %v760
    %v2182 = vmul.f32 %v2118, %v764
    %v2183 = vmul.f32 %v2119, %v768
    %v2184 = vmul.f32 %v2120, %v772
    %v2185 = vmul.f32 %v2121, %v776
    %v2186 = vmul.f32 %v2122, %v780
    %v2187 = vmul.f32 %v2123, %v784
    %v2188 = vmul.f32 %v2124, %v788
    %v2189 = vmul.f32 %v2125, %v792
    %v2190 = vmul.f32 %v2126, %v796
    %v2191 = vmul.f32 %v2127, %v800
    %v2192 = vmul.f32 %v2128, %v804
    %v2193 = vmul.f32 %v2129, %v808
    %v2194 = vmul.f32 %v2130, %v812
    %v2195 = vmul.f32 %v2131, %v816
    %v2196 = vmul.f32 %v2132, %v820
    %v2197 = vmul.f32 %v2133, %v760
    %v2198 = vmul.f32 %v2134, %v764
    %v2199 = vmul.f32 %v2135, %v768
    %v2200 = vmul.f32 %v2136, %v772
    %v2201 = vmul.f32 %v2137, %v776
    %v2202 = vmul.f32 %v2138, %v780
    %v2203 = vmul.f32 %v2139, %v784
    %v2204 = vmul.f32 %v2140, %v788
    %v2205 = vmul.f32 %v2141, %v792
    %v2206 = vmul.f32 %v2142, %v796
    %v2207 = vmul.f32 %v2143, %v800
    %v2208 = vmul.f32 %v2144, %v804
    %v2209 = vmul.f32 %v2145, %v808
    %v2210 = vmul.f32 %v2146, %v812
    %v2211 = vmul.f32 %v2147, %v816
    %v2212 = vmul.f32 %v2148, %v820
    %v2213 = vmax.f32 %v2149, %v2150
    %v2214 = vmax.f32 %v2165, %v2166
    %v2215 = vmax.f32 %v2181, %v2182
    %v2216 = vmax.f32 %v2197, %v2198
    %v2217 = vmax.f32 %v2151, %v2152
    %v2218 = vmax.f32 %v2167, %v2168
    %v2219 = vmax.f32 %v2183, %v2184
    %v2220 = vmax.f32 %v2199, %v2200
    %v2221 = vmax.f32 %v2153, %v2154
    %v2222 = vmax.f32 %v2169, %v2170
    %v2223 = vmax.f32 %v2185, %v2186
    %v2224 = vmax.f32 %v2201, %v2202
    %v2225 = vmax.f32 %v2155, %v2156
    %v2226 = vmax.f32 %v2171, %v2172
    %v2227 = vmax.f32 %v2187, %v2188
    %v2228 = vmax.f32 %v2203, %v2204
    %v2229 = vmax.f32 %v2157, %v2158
    %v2230 = vmax.f32 %v2173, %v2174
    %v2231 = vmax.f32 %v2189, %v2190
    %v2232 = vmax.f32 %v2205, %v2206
    %v2233 = vmax.f32 %v2159, %v2160
    %v2234 = vmax.f32 %v2175, %v2176
    %v2235 = vmax.f32 %v2191, %v2192
    %v2236 = vmax.f32 %v2207, %v2208
    %v2237 = vmax.f32 %v2161, %v2162
    %v2238 = vmax.f32 %v2177, %v2178
    %v2239 = vmax.f32 %v2193, %v2194
    %v2240 = vmax.f32 %v2209, %v2210
    %v2241 = vmax.f32 %v2163, %v2164
    %v2242 = vmax.f32 %v2179, %v2180
    %v2243 = vmax.f32 %v2195, %v2196
    %v2244 = vmax.f32 %v2211, %v2212
    %v2245 = vmax.f32 %v2213, %v2217
    %v2246 = vmax.f32 %v2214, %v2218
    %v2247 = vmax.f32 %v2215, %v2219
    %v2248 = vmax.f32 %v2216, %v2220
    %v2249 = vmax.f32 %v2221, %v2225
    %v2250 = vmax.f32 %v2222, %v2226
    %v2251 = vmax.f32 %v2223, %v2227
    %v2252 = vmax.f32 %v2224, %v2228
    %v2253 = vmax.f32 %v2229, %v2233
    %v2254 = vmax.f32 %v2230, %v2234
    %v2255 = vmax.f32 %v2231, %v2235
    %v2256 = vmax.f32 %v2232, %v2236
    %v2257 = vmax.f32 %v2237, %v2241
    %v2258 = vmax.f32 %v2238, %v2242
    %v2259 = vmax.f32 %v2239, %v2243
    %v2260 = vmax.f32 %v2240, %v2244
    %v2261 = vmax.f32 %v2245, %v2249
    %v2262 = vmax.f32 %v2246, %v2250
    %v2263 = vmax.f32 %v2247, %v2251
    %v2264 = vmax.f32 %v2248, %v2252
    %v2265 = vmax.f32 %v2253, %v2257
    %v2266 = vmax.f32 %v2254, %v2258
    %v2267 = vmax.f32 %v2255, %v2259
    %v2268 = vmax.f32 %v2256, %v2260
    %v2269 = vmax.f32 %v2261, %v2265
    %v2270 = vmax.f32 %v2262, %v2266
    %v2271 = vmax.f32 %v2263, %v2267
    %v2272 = vmax.f32 %v2264, %v2268
    %v2273 = vmax.f32 %v77, %v78
    %v2274 = vrot.slane %v2273, 4
    %v2275 = vmax.f32 %v2273, %v2274
    %v2276 = vrot.slane %v2275, 2
    %v2277 = vmax.f32 %v2275, %v2276
    %v2278 = vrot.slane %v2277, 1
    %v2279 = vmax.f32 %v2277, %v2278
    %vm2280 = vcmp.gt.f32.partialorder %v2279, 0.0
    %v2281 = vpack.c.bf16 %v2270, %v2269
    %v2282 = vpack.c.bf16 %v2272, %v2271
    %v2283 = vld [vmem:[%s7] sm:$0xff]
    %v2284 = vld [vmem:[%s7 + $0x8] sm:$0xff]
    %v2285 = vld [vmem:[%s7 + $0x10] sm:$0xff]
    %v2286 = vld [vmem:[%s7 + $0x18] sm:$0xff]
    %2288 = vset.pattern.permute.xlu0 0
    %2289 = vperm.xlu0 %2288, %v2283
    %v2290 = vpop.permute.xlu0 %2289
    %2293 = vset.pattern.permute.xlu0 0
    %2294 = vperm.xlu0 %2293, %v2284
    %v2295 = vpop.permute.xlu0 %2294
    %2298 = vset.pattern.permute.xlu0 0
    %2299 = vperm.xlu0 %2298, %v2285
    %v2300 = vpop.permute.xlu0 %2299
    %2303 = vset.pattern.permute.xlu0 0
    %2304 = vperm.xlu0 %2303, %v2286
    %v2305 = vpop.permute.xlu0 %2304
    %v2311 = vunpack.c.l.b16 %v67
    %v2312 = vunpack.c.l.b16 %v68
    %v2313 = vunpack.c.l.b16 %v69
    %v2314 = vunpack.c.l.b16 %v70
    %v2315 = vpack.c.b16 %v2312, %v2311
    %v2316 = vpack.c.b16 %v2314, %v2313
    %v2318 = vsel %vm957, %v2315, 0
    %v2321 = vsel %vm957, %v2316, 0
    %2323 = vmatprep.subr.bf16.mxu0 0
    %2324 = vmatpush1.bf16.msra.mxu0 0
    %2325 = vmatprep.subr.bf16.mxu0 0
    %2326 = vmatpush1.bf16.msra.mxu0 0
    %2327 = vmatprep.subr.bf16.mxu0 0
    %2328 = vmatpush1.bf16.msra.mxu0 0
    %2329 = vmatprep.subr.bf16.mxu0 0
    %2330 = vmatpush1.bf16.msra.mxu0 0
    %2331 = vmatprep.subr.bf16.mxu0 0
    %2332 = vmatpush1.bf16.msra.mxu0 0
    %2333 = vmatprep.subr.bf16.mxu0 0
    %2334 = vmatpush1.bf16.msra.mxu0 0
    %2335 = vmatprep.subr.bf16.mxu0 0
    %2336 = vmatpush1.bf16.msra.mxu0 %v2282
    %2337 = vmatprep.subr.bf16.mxu0 0
    %2338 = vmatpush1.bf16.msra.mxu0 %v2281
    %2339 = vmatprep.subr.bf16.mxu0 0
    %2340 = vmatpush2.bf16.msra.mxu0 0
    %2341 = vmatprep.subr.bf16.mxu0 0
    %2342 = vmatpush2.bf16.msra.mxu0 0
    %2343 = vmatprep.subr.bf16.mxu0 0
    %2344 = vmatpush2.bf16.msra.mxu0 0
    %2345 = vmatprep.subr.bf16.mxu0 0
    %2346 = vmatpush2.bf16.msra.mxu0 0
    %2347 = vmatprep.subr.bf16.mxu0 0
    %2348 = vmatpush2.bf16.msra.mxu0 0
    %2349 = vmatprep.subr.bf16.mxu0 0
    %2350 = vmatpush2.bf16.msra.mxu0 0
    %2351 = vmatprep.subr.bf16.mxu0 0
    %2352 = vmatpush2.bf16.msra.mxu0 0
    %2353 = vmatprep.subr.bf16.mxu0 0
    %2354 = vmatpush2.bf16.msra.mxu0 0
    %2355 = vmatprep.mubr.bf16.mxu0 0
    %2356 = vmatmul.mubr.bf16.gmra.mxu0 %v2318
    %v2357 = vpop.f32.mrf.mxu0
    %v2358 = vadd.f32 %v2290, %v2357
    %v2359 = vpop.f32.mrf.mxu0
    %v2360 = vpop.f32.mrf.mxu0
    %v2361 = vadd.f32 %v2295, %v2360
    %v2362 = vpop.f32.mrf.mxu0
    %2363 = vmatprep.mubr.bf16.mxu0 0
    %2364 = vmatmul.mubr.bf16.gmra.mxu0 %v2321
    %v2365 = vpop.f32.mrf.mxu0
    %v2366 = vadd.f32 %v2300, %v2365
    %v2367 = vpop.f32.mrf.mxu0
    %v2368 = vpop.f32.mrf.mxu0
    %v2369 = vadd.f32 %v2305, %v2368
    %v2370 = vpop.f32.mrf.mxu0
    %2371 = vdwg.mxu0
    %v2372 = vmax.f32 %v2358, 0.0
    %v2373 = vmax.f32 %v2361, 0.0
    %v2374 = vmax.f32 %v2366, 0.0
    %v2375 = vmax.f32 %v2369, 0.0
    %v2376 = vpack.c.bf16 %v2373, %v2372
    %v2377 = vpack.c.bf16 %v2375, %v2374
    %v2378 = vld [vmem:[%s9] sm:$0xff]
    %v2379 = vld [vmem:[%s9 + $0x8] sm:$0xff]
    %v2380 = vld [vmem:[%s9 + $0x10] sm:$0xff]
    %v2381 = vld [vmem:[%s9 + $0x18] sm:$0xff]
    %2383 = vset.pattern.permute.xlu0 0
    %2384 = vperm.xlu0 %2383, %v2378
    %v2385 = vpop.permute.xlu0 %2384
    %2388 = vset.pattern.permute.xlu0 0
    %2389 = vperm.xlu0 %2388, %v2379
    %v2390 = vpop.permute.xlu0 %2389
    %2393 = vset.pattern.permute.xlu0 0
    %2394 = vperm.xlu0 %2393, %v2380
    %v2395 = vpop.permute.xlu0 %2394
    %2398 = vset.pattern.permute.xlu0 0
    %2399 = vperm.xlu0 %2398, %v2381
    %v2400 = vpop.permute.xlu0 %2399
    %v2406 = vunpack.c.l.b16 %v71
    %v2407 = vunpack.c.l.b16 %v72
    %v2408 = vunpack.c.l.b16 %v73
    %v2409 = vunpack.c.l.b16 %v74
    %v2410 = vpack.c.b16 %v2407, %v2406
    %v2411 = vpack.c.b16 %v2409, %v2408
    %v2413 = vsel %vm957, %v2410, 0
    %v2416 = vsel %vm957, %v2411, 0
    %2418 = vmatprep.subr.bf16.mxu0 0
    %2419 = vmatpush1.bf16.msra.mxu0 0
    %2420 = vmatprep.subr.bf16.mxu0 0
    %2421 = vmatpush1.bf16.msra.mxu0 0
    %2422 = vmatprep.subr.bf16.mxu0 0
    %2423 = vmatpush1.bf16.msra.mxu0 0
    %2424 = vmatprep.subr.bf16.mxu0 0
    %2425 = vmatpush1.bf16.msra.mxu0 0
    %2426 = vmatprep.subr.bf16.mxu0 0
    %2427 = vmatpush1.bf16.msra.mxu0 0
    %2428 = vmatprep.subr.bf16.mxu0 0
    %2429 = vmatpush1.bf16.msra.mxu0 0
    %2430 = vmatprep.subr.bf16.mxu0 0
    %2431 = vmatpush1.bf16.msra.mxu0 %v2377
    %2432 = vmatprep.subr.bf16.mxu0 0
    %2433 = vmatpush1.bf16.msra.mxu0 %v2376
    %2434 = vmatprep.subr.bf16.mxu0 0
    %2435 = vmatpush2.bf16.msra.mxu0 0
    %2436 = vmatprep.subr.bf16.mxu0 0
    %2437 = vmatpush2.bf16.msra.mxu0 0
    %2438 = vmatprep.subr.bf16.mxu0 0
    %2439 = vmatpush2.bf16.msra.mxu0 0
    %2440 = vmatprep.subr.bf16.mxu0 0
    %2441 = vmatpush2.bf16.msra.mxu0 0
    %2442 = vmatprep.subr.bf16.mxu0 0
    %2443 = vmatpush2.bf16.msra.mxu0 0
    %2444 = vmatprep.subr.bf16.mxu0 0
    %2445 = vmatpush2.bf16.msra.mxu0 0
    %2446 = vmatprep.subr.bf16.mxu0 0
    %2447 = vmatpush2.bf16.msra.mxu0 0
    %2448 = vmatprep.subr.bf16.mxu0 0
    %2449 = vmatpush2.bf16.msra.mxu0 0
    %2450 = vmatprep.mubr.bf16.mxu0 0
    %2451 = vmatmul.mubr.bf16.gmra.mxu0 %v2413
    %v2452 = vpop.f32.mrf.mxu0
    %v2453 = vadd.f32 %v2385, %v2452
    %v2454 = vpop.f32.mrf.mxu0
    %v2455 = vpop.f32.mrf.mxu0
    %v2456 = vadd.f32 %v2390, %v2455
    %v2457 = vpop.f32.mrf.mxu0
    %2458 = vmatprep.mubr.bf16.mxu0 0
    %2459 = vmatmul.mubr.bf16.gmra.mxu0 %v2416
    %v2460 = vpop.f32.mrf.mxu0
    %v2461 = vadd.f32 %v2395, %v2460
    %v2462 = vpop.f32.mrf.mxu0
    %v2463 = vpop.f32.mrf.mxu0
    %v2464 = vadd.f32 %v2400, %v2463
    %v2465 = vpop.f32.mrf.mxu0
    %2466 = vdwg.mxu0
    %v2467 = vsel %vm2280, 1, 0
    %vm2468 = vcmp.eq.s32.totalorder %v2467, 1
    %v2469 = vsel %vm2468, %v2453, 0.0
    %v2470 = vsel %vm2468, %v2456, 0.0
    %v2471 = vsel %vm2468, %v2461, 0.0
    %v2472 = vsel %vm2468, %v2464, 0.0
    %2473 = vst [vmem:[#allocation5] sm:$0xff] %v2469
    %2474 = vst [vmem:[#allocation5 + $0x8] sm:$0xff] %v2470
    %2475 = vst [vmem:[#allocation5 + $0x10] sm:$0xff] %v2471
    %2476 = vst [vmem:[#allocation5 + $0x18] sm:$0xff] %v2472
    // Predicated region
    $region46: #{tpu_custom_call.1} parent=1 // pred_check
      _
    $region47: #{tpu_custom_call.1} parent=1 // pred_check_branch
      %2478 = sbr.rel (0) target = $region49
    $region48: #{tpu_custom_call.1} parent=1 // pred_region
      %s2480 = ssub.s32 512, 512
      %2481 = vsyncadd [#allocation4], %s2480
      %s2482 = sshll.u32 [#allocation5], 4
      %s2483 = int_to_ptr.vmem [resolvable:$true] %s2482
      %2488 = dma.vmem_to_hbm [thread:$0]  %s2483, 512, %s10, [#allocation4], 128, 128, 8
    $region49: #{tpu_custom_call.1} parent=1 // pred_fallthru
      _
    // Predicated region
    $region50: #{tpu_custom_call.1} parent=1 // pred_check
      _
    $region51: #{tpu_custom_call.1} parent=1 // pred_check_branch
      %2490 = sbr.rel (0) target = $region53
    $region52: #{tpu_custom_call.1} parent=1 // pred_region
      %2491 = dma.done [#allocation4], 512
    $region53: #{tpu_custom_call.1} parent=1 // pred_fallthru
      _
    %2492 = vsyncpa [#allocation3], 1
    %2493 = vsyncpa [#allocation4], 1

</llo_original>
